<compile_context>
chip_gen: v7x
topology: tpu7x:2x2x1
jax: 0.10.0
libtpu: 0.0.40
codegen_flags: <defaults>
</compile_context>

<pallas_src>
import math

import jax
import jax.numpy as jnp
import numpy as np
from jax.experimental import pallas as pl
from jax.experimental.pallas import tpu as pltpu


def _rat_kernel(xq_ref, xf_ref, rel_ref, wq_ref, bq_ref, wkv_ref, bkv_ref,
                relk_ref, relv_ref, hpool_ref, hexp_ref, wo_ref, bo_ref,
                w1_ref, b1_ref, w2_ref, b2_ref, out_ref):
    TQ, Dp = xq_ref.shape
    S = xf_ref.shape[0]
    Rp = relk_ref.shape[0]
    Hp = hpool_ref.shape[1]
    dph = Dp // Hp                       # true d_k (4): heads were padded, not dph
    f32 = jnp.float32

    def mm(a, b):
        # bf16 MXU operands, f32 accumulation; elementwise math stays f32.
        return jnp.dot(a.astype(jnp.bfloat16), b.astype(jnp.bfloat16),
                       preferred_element_type=f32)

    xq = xq_ref[...]                     # [TQ, Dp]  query-tile rows
    xf = xf_ref[...]                     # [S, Dp]   full sequence (for K/V)

    # ---- fused projections: full-width MXU matmuls --------------------------
    q2 = mm(xq, wq_ref[...]) + bq_ref[...]           # [TQ, Dp]
    kv = mm(xf, wkv_ref[...]) + bkv_ref[...]         # [S, 2*Dp]
    k2 = kv[:, :Dp]                                  # [S, Dp]  (128-aligned slice)
    v2 = kv[:, Dp:]                                  # [S, Dp]

    # ---- relation factorization: one-hot gather of the tiny embedding table -
    rel = rel_ref[...]                               # [TQ, S] int32
    iota_r = jax.lax.broadcasted_iota(jnp.int32, (TQ, S, Rp), 2)
    onehot = (rel[:, :, None] == iota_r).astype(f32)           # [TQ, S, Rp]
    onehot_flat = onehot.reshape(TQ * S, Rp)
    gk = mm(onehot_flat, relk_ref[...]).reshape(TQ, S, Dp)     # rel_k[rel[i,j]] tiled on lanes
    gv = mm(onehot_flat, relv_ref[...]).reshape(TQ, S, Dp)     # rel_v[rel[i,j]] tiled on lanes

    # ---- relation-aware scores ----------------------------------------------
    #   scores[i,j,h] = sum_d q[i,h,d] * (k[j,h,d] + rel_k[rel[i,j],d]) / sqrt(dph)
    # one lane-dense VPU multiply, then head pooling on the MXU (K = 128).
    p = q2[:, None, :] * (k2[None, :, :] + gk)                 # [TQ, S, Dp]
    scores = mm(p.reshape(TQ * S, Dp), hpool_ref[...]).reshape(TQ, S, Hp)
    scores = scores * (1.0 / math.sqrt(dph))

    # ---- softmax over keys (axis=1); reciprocal on the EUP ------------------
    m = jnp.max(scores, axis=1, keepdims=True)
    e = jnp.exp(scores - m)
    attn = e * pl.reciprocal(jnp.sum(e, axis=1, keepdims=True), approx=True)

    # ---- context: expand head weights back to lanes, weight (v + rel_v) -----
    a_exp = mm(attn.reshape(TQ * S, Hp), hexp_ref[...]).reshape(TQ, S, Dp)
    ctx = jnp.sum(a_exp * (v2[None, :, :] + gv), axis=1)       # [TQ, Dp]

    # ---- output projection + position-wise feed forward ---------------------
    # TODO(synk): assumes the Annotated-Transformer FFN variant
    # (w2(relu(w1(x))), no internal LayerNorm / residual), dropout_amount == 0.
    attn_out = mm(ctx, wo_ref[...]) + bo_ref[...]
    h1 = jnp.maximum(mm(attn_out, w1_ref[...]) + b1_ref[...], 0.0)
    out = mm(h1, w2_ref[...]) + b2_ref[...]
    out_ref[...] = out.astype(out_ref.dtype)


def rat_transformer_forward(hidden, relationship_matrix, params):
    """hidden: [1, S, D] f32, relationship_matrix: [1, S, S] int -> [1, S, D]."""
    B, S, D = hidden.shape
    assert B == 1
    H = params['heads_num']
    dph = D // H
    assert H * dph == D
    R = params['relation_k_emb'].shape[0]

    # ---- padded, lane-dense layout ------------------------------------------
    Dp = ((D + 127) // 128) * 128        # 120 -> 128
    assert Dp % dph == 0
    Hp = Dp // dph                       # 30 -> 32 heads (2 zero heads)
    Rp = max(8, ((R + 7) // 8) * 8)      # pad relation count
    assert S % 8 == 0, "TODO(synk): pad/mask sequence length for S % 8 != 0"
    TQ = S if S <= 128 else 128          # query tile
    assert S % TQ == 0

    def pad2(a, r, c):
        return jnp.zeros((r, c), jnp.float32).at[:a.shape[0], :a.shape[1]].set(a)

    x_p = pad2(hidden[0].astype(jnp.float32), S, Dp)              # [S, Dp]
    rel = relationship_matrix[0].astype(jnp.int32)                # [S, S]

    wq_p = pad2(params['wq'].T, Dp, Dp)
    bq_p = pad2(params['bq'][None, :], 1, Dp)
    wkv_p = jnp.concatenate([pad2(params['wk'].T, Dp, Dp),
                             pad2(params['wv'].T, Dp, Dp)], axis=1)   # [Dp, 2Dp]
    bkv_p = jnp.concatenate([pad2(params['bk'][None, :], 1, Dp),
                             pad2(params['bv'][None, :], 1, Dp)], axis=1)
    wo_p = pad2(params['wo'].T, Dp, Dp)
    bo_p = pad2(params['bo'][None, :], 1, Dp)
    w1_p = pad2(params['w1'].T, Dp, Dp)
    b1_p = pad2(params['b1'][None, :], 1, Dp)
    w2_p = pad2(params['w2'].T, Dp, Dp)
    b2_p = pad2(params['b2'][None, :], 1, Dp)

    # Relation tables, tiled across head lanes (column h*dph+d holds emb[:, d]),
    # zeroed on padded-head lanes.
    head_mask = (jnp.arange(Dp) < H * dph).astype(jnp.float32)[None, :]
    relk_t = jnp.tile(pad2(params['relation_k_emb'], Rp, dph), (1, Hp)) * head_mask
    relv_t = jnp.tile(pad2(params['relation_v_emb'], Rp, dph), (1, Hp)) * head_mask

    # Constant 0/1 lane<->head pooling matrices.
    hpool = (jnp.arange(Dp)[:, None] // dph ==
             jnp.arange(Hp)[None, :]).astype(jnp.float32)            # [Dp, Hp]
    hexp = hpool.T                                                   # [Hp, Dp]

    inputs = [x_p, x_p, rel, wq_p, bq_p, wkv_p, bkv_p, relk_t, relv_t,
              hpool, hexp, wo_p, bo_p, w1_p, b1_p, w2_p, b2_p]

    def full_spec(a):
        nd = a.ndim
        return pl.BlockSpec(a.shape, lambda *_: (0,) * nd)

    in_specs = [
        pl.BlockSpec((TQ, Dp), lambda i: (i, 0)),      # query-tile rows of x
        full_spec(x_p),                                # full x for K/V
        pl.BlockSpec((TQ, S), lambda i: (i, 0)),       # relation rows of the tile
    ] + [full_spec(a) for a in inputs[3:]]

    out = pl.pallas_call(
        _rat_kernel,
        out_shape=jax.ShapeDtypeStruct((S, Dp), jnp.float32),
        grid=(S // TQ,),
        in_specs=in_specs,
        out_specs=pl.BlockSpec((TQ, Dp), lambda i: (i, 0)),
        compiler_params=pltpu.CompilerParams(dimension_semantics=("parallel",)),
    )(*inputs)
    return out[:, :D][None]


def reference_forward(hidden, relationship_matrix, params):
    """Pure-JAX f32 reference reproducing the PyTorch semantics."""
    B, S, D = hidden.shape
    H = params['heads_num']
    dph = D // H
    x = hidden[0]

    def proj(w, b):
        return (x @ w.T + b).reshape(S, H, dph).transpose(1, 0, 2)  # [H,S,dph]

    q = proj(params['wq'], params['bq'])
    k = proj(params['wk'], params['bk'])
    v = proj(params['wv'], params['bv'])
    rel = relationship_matrix[0]
    rk = params['relation_k_emb'][rel]
    rv = params['relation_v_emb'][rel]
    scores = (jnp.einsum('hid,hjd->hij', q, k)
              + jnp.einsum('hid,ijd->hij', q, rk)) / math.sqrt(dph)
    attn = jax.nn.softmax(scores, axis=-1)
    ctx = (jnp.einsum('hij,hjd->hid', attn, v)
           + jnp.einsum('hij,ijd->hid', attn, rv))
    ctx_flat = jnp.transpose(ctx, (1, 0, 2)).reshape(S, D)
    attn_out = ctx_flat @ params['wo'].T + params['bo']
    h1 = jax.nn.relu(attn_out @ params['w1'].T + params['b1'])
    out = h1 @ params['w2'].T + params['b2']
    return out[None]


def init_params(key, D, H, R):
    dph = D // H
    keys = jax.random.split(key, 14)

    def lin(kw, kb, dout, din):
        s = 1.0 / math.sqrt(din)
        return (jax.random.uniform(kw, (dout, din), jnp.float32, -s, s),
                jax.random.uniform(kb, (dout,), jnp.float32, -s, s))

    wq, bq = lin(keys[0], keys[1], D, D)
    wk, bk = lin(keys[2], keys[3], D, D)
    wv, bv = lin(keys[4], keys[5], D, D)
    wo, bo = lin(keys[6], keys[7], D, D)
    w1, b1 = lin(keys[8], keys[9], D, D)    # PositionwiseFeedForward(D, D)
    w2, b2 = lin(keys[10], keys[11], D, D)
    rel_k_emb = jax.random.normal(keys[12], (R, dph), jnp.float32)
    rel_v_emb = jax.random.normal(keys[13], (R, dph), jnp.float32)
    return dict(heads_num=H, wq=wq, bq=bq, wk=wk, bk=bk, wv=wv, bv=bv,
                wo=wo, bo=bo, w1=w1, b1=b1, w2=w2, b2=b2,
                relation_k_emb=rel_k_emb, relation_v_emb=rel_v_emb)


if __name__ == "__main__":
    key = jax.random.PRNGKey(0)
    S, H, dph, R = 8, 30, 4, 10
    D = H * dph        # input_size == state_size == 120 (divisible by 30 heads)

    k_params, k_hidden, k_rel = jax.random.split(key, 3)
    params = init_params(k_params, D, H, R)
    hidden = jax.random.normal(k_hidden, (1, S, D), jnp.float32)
    relationship_matrix = jax.random.randint(k_rel, (1, S, S), 0, R, jnp.int32)

    out = jax.block_until_ready(
        rat_transformer_forward(hidden, relationship_matrix, params))
    ref = reference_forward(hidden, relationship_matrix, params)
    assert out.shape == (1, S, D)
    # Tolerance 2e-2: MXU operands are bf16 (per perf review); elementwise math
    # and accumulation stay f32.
    np.testing.assert_allclose(np.asarray(out), np.asarray(ref),
                               rtol=2e-2, atol=2e-2)
    print("KERNEL_OK")
</pallas_src>

<mosaic_0001>
module attributes {stable_mosaic.version = 11 : i64} {
  func.func @_rat_kernel(%arg0: i32, %arg1: memref<8x128xf32, #tpu.memory_space<vmem>>, %arg2: memref<8x128xf32, #tpu.memory_space<vmem>>, %arg3: memref<8x8xi32, #tpu.memory_space<vmem>>, %arg4: memref<128x128xf32, #tpu.memory_space<vmem>>, %arg5: memref<1x128xf32, #tpu.memory_space<vmem>>, %arg6: memref<128x256xf32, #tpu.memory_space<vmem>>, %arg7: memref<1x256xf32, #tpu.memory_space<vmem>>, %arg8: memref<16x128xf32, #tpu.memory_space<vmem>>, %arg9: memref<16x128xf32, #tpu.memory_space<vmem>>, %arg10: memref<128x32xf32, #tpu.memory_space<vmem>>, %arg11: memref<32x128xf32, #tpu.memory_space<vmem>>, %arg12: memref<128x128xf32, #tpu.memory_space<vmem>>, %arg13: memref<1x128xf32, #tpu.memory_space<vmem>>, %arg14: memref<128x128xf32, #tpu.memory_space<vmem>>, %arg15: memref<1x128xf32, #tpu.memory_space<vmem>>, %arg16: memref<128x128xf32, #tpu.memory_space<vmem>>, %arg17: memref<1x128xf32, #tpu.memory_space<vmem>>, %arg18: memref<8x128xf32, #tpu.memory_space<vmem>>) attributes {dimension_semantics = [#tpu.dimension_semantics<parallel>], iteration_bounds = array<i64: 1>, scalar_prefetch = 0 : i64, scratch_operands = 0 : i64, tpu.core_type = #tpu.core_type<tc>, window_params = [{transform_indices = @transform_0, window_bounds = array<i64: 8, 128>}, {pipeline_mode = #tpu.pipeline_mode<synchronous>, transform_indices = @transform_1, window_bounds = array<i64: 8, 128>}, {transform_indices = @transform_2, window_bounds = array<i64: 8, 8>}, {pipeline_mode = #tpu.pipeline_mode<synchronous>, transform_indices = @transform_3, window_bounds = array<i64: 128, 128>}, {pipeline_mode = #tpu.pipeline_mode<synchronous>, transform_indices = @transform_4, window_bounds = array<i64: 1, 128>}, {pipeline_mode = #tpu.pipeline_mode<synchronous>, transform_indices = @transform_5, window_bounds = array<i64: 128, 256>}, {pipeline_mode = #tpu.pipeline_mode<synchronous>, transform_indices = @transform_6, window_bounds = array<i64: 1, 256>}, {pipeline_mode = #tpu.pipeline_mode<synchronous>, transform_indices = @transform_7, window_bounds = array<i64: 16, 128>}, {pipeline_mode = #tpu.pipeline_mode<synchronous>, transform_indices = @transform_8, window_bounds = array<i64: 16, 128>}, {pipeline_mode = #tpu.pipeline_mode<synchronous>, transform_indices = @transform_9, window_bounds = array<i64: 128, 32>}, {pipeline_mode = #tpu.pipeline_mode<synchronous>, transform_indices = @transform_10, window_bounds = array<i64: 32, 128>}, {pipeline_mode = #tpu.pipeline_mode<synchronous>, transform_indices = @transform_11, window_bounds = array<i64: 128, 128>}, {pipeline_mode = #tpu.pipeline_mode<synchronous>, transform_indices = @transform_12, window_bounds = array<i64: 1, 128>}, {pipeline_mode = #tpu.pipeline_mode<synchronous>, transform_indices = @transform_13, window_bounds = array<i64: 128, 128>}, {pipeline_mode = #tpu.pipeline_mode<synchronous>, transform_indices = @transform_14, window_bounds = array<i64: 1, 128>}, {pipeline_mode = #tpu.pipeline_mode<synchronous>, transform_indices = @transform_15, window_bounds = array<i64: 128, 128>}, {pipeline_mode = #tpu.pipeline_mode<synchronous>, transform_indices = @transform_16, window_bounds = array<i64: 1, 128>}, {transform_indices = @transform_17, window_bounds = array<i64: 8, 128>}]} {
    %c0 = arith.constant 0 : index
    %c0_0 = arith.constant 0 : index
    %0 = vector.load %arg1[%c0, %c0_0] : memref<8x128xf32, #tpu.memory_space<vmem>>, vector<8x128xf32>
    %c0_1 = arith.constant 0 : index
    %c0_2 = arith.constant 0 : index
    %1 = vector.load %arg2[%c0_1, %c0_2] : memref<8x128xf32, #tpu.memory_space<vmem>>, vector<8x128xf32>
    %c0_3 = arith.constant 0 : index
    %c0_4 = arith.constant 0 : index
    %2 = vector.load %arg4[%c0_3, %c0_4] : memref<128x128xf32, #tpu.memory_space<vmem>>, vector<128x128xf32>
    %3 = arith.truncf %0 : vector<8x128xf32> to vector<8x128xbf16>
    %4 = arith.truncf %2 : vector<128x128xf32> to vector<128x128xbf16>
    %cst = arith.constant dense<0.000000e+00> : vector<8x128xf32>
    %5 = tpu.matmul %3, %4, %cst {dimension_numbers = #tpu.dot_dimension_numbers<[1], [0], [0], [1], [0, 0, 1, 1], [], []>} : vector<8x128xbf16>, vector<128x128xbf16>, vector<8x128xf32> -> vector<8x128xf32>
    %c0_5 = arith.constant 0 : index
    %c0_6 = arith.constant 0 : index
    %6 = vector.load %arg5[%c0_5, %c0_6] : memref<1x128xf32, #tpu.memory_space<vmem>>, vector<1x128xf32>
    %7 = vector.broadcast %6 : vector<1x128xf32> to vector<8x128xf32>
    %8 = arith.addf %5, %7 : vector<8x128xf32>
    %c0_7 = arith.constant 0 : index
    %c0_8 = arith.constant 0 : index
    %9 = vector.load %arg6[%c0_7, %c0_8] : memref<128x256xf32, #tpu.memory_space<vmem>>, vector<128x256xf32>
    %10 = arith.truncf %1 : vector<8x128xf32> to vector<8x128xbf16>
    %11 = arith.truncf %9 : vector<128x256xf32> to vector<128x256xbf16>
    %cst_9 = arith.constant dense<0.000000e+00> : vector<8x256xf32>
    %12 = tpu.matmul %10, %11, %cst_9 {dimension_numbers = #tpu.dot_dimension_numbers<[1], [0], [0], [1], [0, 0, 1, 1], [], []>} : vector<8x128xbf16>, vector<128x256xbf16>, vector<8x256xf32> -> vector<8x256xf32>
    %c0_10 = arith.constant 0 : index
    %c0_11 = arith.constant 0 : index
    %13 = vector.load %arg7[%c0_10, %c0_11] : memref<1x256xf32, #tpu.memory_space<vmem>>, vector<1x256xf32>
    %14 = vector.broadcast %13 : vector<1x256xf32> to vector<8x256xf32>
    %15 = arith.addf %12, %14 : vector<8x256xf32>
    %16 = vector.extract_strided_slice %15 {offsets = [0, 0], sizes = [8, 128], strides = [1, 1]} : vector<8x256xf32> to vector<8x128xf32>
    %17 = vector.extract_strided_slice %15 {offsets = [0, 128], sizes = [8, 128], strides = [1, 1]} : vector<8x256xf32> to vector<8x128xf32>
    %c0_12 = arith.constant 0 : index
    %c0_13 = arith.constant 0 : index
    %18 = vector.load %arg3[%c0_12, %c0_13] : memref<8x8xi32, #tpu.memory_space<vmem>>, vector<8x8xi32>
    %19 = tpu.iota {dimensions = array<i32: 2>} : vector<8x8x16xi32>
    %20 = vector.shape_cast %18 : vector<8x8xi32> to vector<8x8x1xi32>
    %21 = vector.broadcast %20 : vector<8x8x1xi32> to vector<8x8x16xi32>
    %22 = arith.cmpi eq, %21, %19 : vector<8x8x16xi32>
    %23 = arith.extui %22 : vector<8x8x16xi1> to vector<8x8x16xi32>
    %24 = arith.sitofp %23 : vector<8x8x16xi32> to vector<8x8x16xf32>
    %25 = vector.shape_cast %24 : vector<8x8x16xf32> to vector<64x16xf32>
    %c0_14 = arith.constant 0 : index
    %c0_15 = arith.constant 0 : index
    %26 = vector.load %arg8[%c0_14, %c0_15] : memref<16x128xf32, #tpu.memory_space<vmem>>, vector<16x128xf32>
    %27 = arith.truncf %25 : vector<64x16xf32> to vector<64x16xbf16>
    %28 = arith.truncf %26 : vector<16x128xf32> to vector<16x128xbf16>
    %cst_16 = arith.constant dense<0.000000e+00> : vector<64x128xf32>
    %29 = tpu.matmul %27, %28, %cst_16 {dimension_numbers = #tpu.dot_dimension_numbers<[1], [0], [0], [1], [0, 0, 1, 1], [], []>} : vector<64x16xbf16>, vector<16x128xbf16>, vector<64x128xf32> -> vector<64x128xf32>
    %30 = vector.shape_cast %29 : vector<64x128xf32> to vector<8x8x128xf32>
    %c0_17 = arith.constant 0 : index
    %c0_18 = arith.constant 0 : index
    %31 = vector.load %arg9[%c0_17, %c0_18] : memref<16x128xf32, #tpu.memory_space<vmem>>, vector<16x128xf32>
    %32 = arith.truncf %25 : vector<64x16xf32> to vector<64x16xbf16>
    %33 = arith.truncf %31 : vector<16x128xf32> to vector<16x128xbf16>
    %cst_19 = arith.constant dense<0.000000e+00> : vector<64x128xf32>
    %34 = tpu.matmul %32, %33, %cst_19 {dimension_numbers = #tpu.dot_dimension_numbers<[1], [0], [0], [1], [0, 0, 1, 1], [], []>} : vector<64x16xbf16>, vector<16x128xbf16>, vector<64x128xf32> -> vector<64x128xf32>
    %35 = vector.shape_cast %34 : vector<64x128xf32> to vector<8x8x128xf32>
    %36 = vector.shape_cast %8 : vector<8x128xf32> to vector<8x1x128xf32>
    %37 = vector.shape_cast %16 : vector<8x128xf32> to vector<1x8x128xf32>
    %38 = vector.broadcast %37 : vector<1x8x128xf32> to vector<8x8x128xf32>
    %39 = arith.addf %38, %30 : vector<8x8x128xf32>
    %40 = vector.broadcast %36 : vector<8x1x128xf32> to vector<8x8x128xf32>
    %41 = arith.mulf %40, %39 : vector<8x8x128xf32>
    %42 = vector.shape_cast %41 : vector<8x8x128xf32> to vector<64x128xf32>
    %c0_20 = arith.constant 0 : index
    %c0_21 = arith.constant 0 : index
    %43 = vector.load %arg10[%c0_20, %c0_21] : memref<128x32xf32, #tpu.memory_space<vmem>>, vector<128x32xf32>
    %44 = arith.truncf %42 : vector<64x128xf32> to vector<64x128xbf16>
    %45 = arith.truncf %43 : vector<128x32xf32> to vector<128x32xbf16>
    %cst_22 = arith.constant dense<0.000000e+00> : vector<64x32xf32>
    %46 = tpu.matmul %44, %45, %cst_22 {dimension_numbers = #tpu.dot_dimension_numbers<[1], [0], [0], [1], [0, 0, 1, 1], [], []>} : vector<64x128xbf16>, vector<128x32xbf16>, vector<64x32xf32> -> vector<64x32xf32>
    %47 = vector.shape_cast %46 : vector<64x32xf32> to vector<8x8x32xf32>
    %cst_23 = arith.constant 5.000000e-01 : f32
    %48 = vector.broadcast %cst_23 : f32 to vector<8x8x32xf32>
    %49 = arith.mulf %47, %48 : vector<8x8x32xf32>
    %cst_24 = arith.constant dense<0xFF800000> : vector<8x32xf32>
    %50 = vector.multi_reduction <maximumf>, %49, %cst_24 [1] : vector<8x8x32xf32> to vector<8x32xf32>
    %51 = vector.shape_cast %50 : vector<8x32xf32> to vector<8x1x32xf32>
    %52 = vector.broadcast %51 : vector<8x1x32xf32> to vector<8x8x32xf32>
    %53 = arith.subf %49, %52 : vector<8x8x32xf32>
    %54 = math.exp %53 : vector<8x8x32xf32>
    %cst_25 = arith.constant dense<0.000000e+00> : vector<8x32xf32>
    %55 = vector.multi_reduction <add>, %54, %cst_25 [1] : vector<8x8x32xf32> to vector<8x32xf32>
    %56 = vector.shape_cast %55 : vector<8x32xf32> to vector<8x1x32xf32>
    %57 = tpu.reciprocal %56 {approx = true} : vector<8x1x32xf32> -> vector<8x1x32xf32>
    %58 = vector.broadcast %57 : vector<8x1x32xf32> to vector<8x8x32xf32>
    %59 = arith.mulf %54, %58 : vector<8x8x32xf32>
    %60 = vector.shape_cast %59 : vector<8x8x32xf32> to vector<64x32xf32>
    %c0_26 = arith.constant 0 : index
    %c0_27 = arith.constant 0 : index
    %61 = vector.load %arg11[%c0_26, %c0_27] : memref<32x128xf32, #tpu.memory_space<vmem>>, vector<32x128xf32>
    %62 = arith.truncf %60 : vector<64x32xf32> to vector<64x32xbf16>
    %63 = arith.truncf %61 : vector<32x128xf32> to vector<32x128xbf16>
    %cst_28 = arith.constant dense<0.000000e+00> : vector<64x128xf32>
    %64 = tpu.matmul %62, %63, %cst_28 {dimension_numbers = #tpu.dot_dimension_numbers<[1], [0], [0], [1], [0, 0, 1, 1], [], []>} : vector<64x32xbf16>, vector<32x128xbf16>, vector<64x128xf32> -> vector<64x128xf32>
    %65 = vector.shape_cast %64 : vector<64x128xf32> to vector<8x8x128xf32>
    %66 = vector.shape_cast %17 : vector<8x128xf32> to vector<1x8x128xf32>
    %67 = vector.broadcast %66 : vector<1x8x128xf32> to vector<8x8x128xf32>
    %68 = arith.addf %67, %35 : vector<8x8x128xf32>
    %69 = arith.mulf %65, %68 : vector<8x8x128xf32>
    %cst_29 = arith.constant dense<0.000000e+00> : vector<8x128xf32>
    %70 = vector.multi_reduction <add>, %69, %cst_29 [1] : vector<8x8x128xf32> to vector<8x128xf32>
    %c0_30 = arith.constant 0 : index
    %c0_31 = arith.constant 0 : index
    %71 = vector.load %arg12[%c0_30, %c0_31] : memref<128x128xf32, #tpu.memory_space<vmem>>, vector<128x128xf32>
    %72 = arith.truncf %70 : vector<8x128xf32> to vector<8x128xbf16>
    %73 = arith.truncf %71 : vector<128x128xf32> to vector<128x128xbf16>
    %cst_32 = arith.constant dense<0.000000e+00> : vector<8x128xf32>
    %74 = tpu.matmul %72, %73, %cst_32 {dimension_numbers = #tpu.dot_dimension_numbers<[1], [0], [0], [1], [0, 0, 1, 1], [], []>} : vector<8x128xbf16>, vector<128x128xbf16>, vector<8x128xf32> -> vector<8x128xf32>
    %c0_33 = arith.constant 0 : index
    %c0_34 = arith.constant 0 : index
    %75 = vector.load %arg13[%c0_33, %c0_34] : memref<1x128xf32, #tpu.memory_space<vmem>>, vector<1x128xf32>
    %76 = vector.broadcast %75 : vector<1x128xf32> to vector<8x128xf32>
    %77 = arith.addf %74, %76 : vector<8x128xf32>
    %c0_35 = arith.constant 0 : index
    %c0_36 = arith.constant 0 : index
    %78 = vector.load %arg14[%c0_35, %c0_36] : memref<128x128xf32, #tpu.memory_space<vmem>>, vector<128x128xf32>
    %79 = arith.truncf %77 : vector<8x128xf32> to vector<8x128xbf16>
    %80 = arith.truncf %78 : vector<128x128xf32> to vector<128x128xbf16>
    %cst_37 = arith.constant dense<0.000000e+00> : vector<8x128xf32>
    %81 = tpu.matmul %79, %80, %cst_37 {dimension_numbers = #tpu.dot_dimension_numbers<[1], [0], [0], [1], [0, 0, 1, 1], [], []>} : vector<8x128xbf16>, vector<128x128xbf16>, vector<8x128xf32> -> vector<8x128xf32>
    %c0_38 = arith.constant 0 : index
    %c0_39 = arith.constant 0 : index
    %82 = vector.load %arg15[%c0_38, %c0_39] : memref<1x128xf32, #tpu.memory_space<vmem>>, vector<1x128xf32>
    %83 = vector.broadcast %82 : vector<1x128xf32> to vector<8x128xf32>
    %84 = arith.addf %81, %83 : vector<8x128xf32>
    %cst_40 = arith.constant 0.000000e+00 : f32
    %85 = vector.broadcast %cst_40 : f32 to vector<8x128xf32>
    %86 = arith.maximumf %84, %85 : vector<8x128xf32>
    %c0_41 = arith.constant 0 : index
    %c0_42 = arith.constant 0 : index
    %87 = vector.load %arg16[%c0_41, %c0_42] : memref<128x128xf32, #tpu.memory_space<vmem>>, vector<128x128xf32>
    %88 = arith.truncf %86 : vector<8x128xf32> to vector<8x128xbf16>
    %89 = arith.truncf %87 : vector<128x128xf32> to vector<128x128xbf16>
    %cst_43 = arith.constant dense<0.000000e+00> : vector<8x128xf32>
    %90 = tpu.matmul %88, %89, %cst_43 {dimension_numbers = #tpu.dot_dimension_numbers<[1], [0], [0], [1], [0, 0, 1, 1], [], []>} : vector<8x128xbf16>, vector<128x128xbf16>, vector<8x128xf32> -> vector<8x128xf32>
    %c0_44 = arith.constant 0 : index
    %c0_45 = arith.constant 0 : index
    %91 = vector.load %arg17[%c0_44, %c0_45] : memref<1x128xf32, #tpu.memory_space<vmem>>, vector<1x128xf32>
    %92 = vector.broadcast %91 : vector<1x128xf32> to vector<8x128xf32>
    %93 = arith.addf %90, %92 : vector<8x128xf32>
    %c0_46 = arith.constant 0 : index
    %c0_47 = arith.constant 0 : index
    %94 = vector.load %arg18[%c0_46, %c0_47] : memref<8x128xf32, #tpu.memory_space<vmem>>, vector<8x128xf32>
    tpu.vector_store %arg18[%c0_46, %c0_47], %93 {strides = array<i32>} : memref<8x128xf32, #tpu.memory_space<vmem>>, vector<8x128xf32>,
    return
  }
  func.func @transform_0(%arg0: i32) -> (i32, i32) {
    %c0_i32 = arith.constant 0 : i32
    %c0_i32_0 = arith.constant 0 : i32
    return %arg0, %c0_i32 : i32, i32
  }
  func.func @transform_1(%arg0: i32) -> (i32, i32) {
    %c0_i32 = arith.constant 0 : i32
    %c0_i32_0 = arith.constant 0 : i32
    %c0_i32_1 = arith.constant 0 : i32
    return %c0_i32, %c0_i32_0 : i32, i32
  }
  func.func @transform_2(%arg0: i32) -> (i32, i32) {
    %c0_i32 = arith.constant 0 : i32
    %c0_i32_0 = arith.constant 0 : i32
    return %arg0, %c0_i32 : i32, i32
  }
  func.func @transform_3(%arg0: i32) -> (i32, i32) {
    %c0_i32 = arith.constant 0 : i32
    %c0_i32_0 = arith.constant 0 : i32
    %c0_i32_1 = arith.constant 0 : i32
    return %c0_i32, %c0_i32_0 : i32, i32
  }
  func.func @transform_4(%arg0: i32) -> (i32, i32) {
    %c0_i32 = arith.constant 0 : i32
    %c0_i32_0 = arith.constant 0 : i32
    %c0_i32_1 = arith.constant 0 : i32
    return %c0_i32, %c0_i32_0 : i32, i32
  }
  func.func @transform_5(%arg0: i32) -> (i32, i32) {
    %c0_i32 = arith.constant 0 : i32
    %c0_i32_0 = arith.constant 0 : i32
    %c0_i32_1 = arith.constant 0 : i32
    return %c0_i32, %c0_i32_0 : i32, i32
  }
  func.func @transform_6(%arg0: i32) -> (i32, i32) {
    %c0_i32 = arith.constant 0 : i32
    %c0_i32_0 = arith.constant 0 : i32
    %c0_i32_1 = arith.constant 0 : i32
    return %c0_i32, %c0_i32_0 : i32, i32
  }
  func.func @transform_7(%arg0: i32) -> (i32, i32) {
    %c0_i32 = arith.constant 0 : i32
    %c0_i32_0 = arith.constant 0 : i32
    %c0_i32_1 = arith.constant 0 : i32
    return %c0_i32, %c0_i32_0 : i32, i32
  }
  func.func @transform_8(%arg0: i32) -> (i32, i32) {
    %c0_i32 = arith.constant 0 : i32
    %c0_i32_0 = arith.constant 0 : i32
    %c0_i32_1 = arith.constant 0 : i32
    return %c0_i32, %c0_i32_0 : i32, i32
  }
  func.func @transform_9(%arg0: i32) -> (i32, i32) {
    %c0_i32 = arith.constant 0 : i32
    %c0_i32_0 = arith.constant 0 : i32
    %c0_i32_1 = arith.constant 0 : i32
    return %c0_i32, %c0_i32_0 : i32, i32
  }
  func.func @transform_10(%arg0: i32) -> (i32, i32) {
    %c0_i32 = arith.constant 0 : i32
    %c0_i32_0 = arith.constant 0 : i32
    %c0_i32_1 = arith.constant 0 : i32
    return %c0_i32, %c0_i32_0 : i32, i32
  }
  func.func @transform_11(%arg0: i32) -> (i32, i32) {
    %c0_i32 = arith.constant 0 : i32
    %c0_i32_0 = arith.constant 0 : i32
    %c0_i32_1 = arith.constant 0 : i32
    return %c0_i32, %c0_i32_0 : i32, i32
  }
  func.func @transform_12(%arg0: i32) -> (i32, i32) {
    %c0_i32 = arith.constant 0 : i32
    %c0_i32_0 = arith.constant 0 : i32
    %c0_i32_1 = arith.constant 0 : i32
    return %c0_i32, %c0_i32_0 : i32, i32
  }
  func.func @transform_13(%arg0: i32) -> (i32, i32) {
    %c0_i32 = arith.constant 0 : i32
    %c0_i32_0 = arith.constant 0 : i32
    %c0_i32_1 = arith.constant 0 : i32
    return %c0_i32, %c0_i32_0 : i32, i32
  }
  func.func @transform_14(%arg0: i32) -> (i32, i32) {
    %c0_i32 = arith.constant 0 : i32
    %c0_i32_0 = arith.constant 0 : i32
    %c0_i32_1 = arith.constant 0 : i32
    return %c0_i32, %c0_i32_0 : i32, i32
  }
  func.func @transform_15(%arg0: i32) -> (i32, i32) {
    %c0_i32 = arith.constant 0 : i32
    %c0_i32_0 = arith.constant 0 : i32
    %c0_i32_1 = arith.constant 0 : i32
    return %c0_i32, %c0_i32_0 : i32, i32
  }
  func.func @transform_16(%arg0: i32) -> (i32, i32) {
    %c0_i32 = arith.constant 0 : i32
    %c0_i32_0 = arith.constant 0 : i32
    %c0_i32_1 = arith.constant 0 : i32
    return %c0_i32, %c0_i32_0 : i32, i32
  }
  func.func @transform_17(%arg0: i32) -> (i32, i32) {
    %c0_i32 = arith.constant 0 : i32
    %c0_i32_0 = arith.constant 0 : i32
    return %arg0, %c0_i32 : i32, i32
  }
}

</mosaic_0001>

<llo_original>
// kernel: tpu_custom_call.1
$region0: #{tpu_custom_call.1}
  #allocation0 [shape = 'u32[]', space=smem, size = 0x4, offset = 0x4, fixed_abs, tag = 'smem constant byte address 0x4 - core index']
  #allocation1 [shape = 'u32[144,128]{1,0:T(1,128)}', space=vmem, size = 0x12000, scoped, tag = 'internal scratch']
  %s0 = inlined_call_operand.hbm [shape: f32[8,128], index: 0, kind: input, shape index: {}]
  %s1 = inlined_call_operand.hbm [shape: f32[8,128], index: 1, kind: input, shape index: {}]
  %s2 = inlined_call_operand.hbm [shape: s32[8,8], index: 2, kind: input, shape index: {}]
  %s3 = inlined_call_operand.vmem [shape: f32[128,128], index: 3, kind: input, shape index: {}]
  %s4 = inlined_call_operand.hbm [shape: f32[1,128], index: 4, kind: input, shape index: {}]
  %s5 = inlined_call_operand.hbm [shape: f32[128,256], index: 5, kind: input, shape index: {}]
  %s6 = inlined_call_operand.vmem [shape: f32[1,256], index: 6, kind: input, shape index: {}]
  %s7 = inlined_call_operand.hbm [shape: f32[16,128], index: 7, kind: input, shape index: {}]
  %s8 = inlined_call_operand.hbm [shape: f32[16,128], index: 8, kind: input, shape index: {}]
  %s9 = inlined_call_operand.vmem [shape: f32[128,32], index: 9, kind: input, shape index: {}]
  %s10 = inlined_call_operand.vmem [shape: f32[32,128], index: 10, kind: input, shape index: {}]
  %s11 = inlined_call_operand.hbm [shape: f32[128,128], index: 11, kind: input, shape index: {}]
  %s12 = inlined_call_operand.vmem [shape: f32[1,128], index: 12, kind: input, shape index: {}]
  %s13 = inlined_call_operand.hbm [shape: f32[128,128], index: 13, kind: input, shape index: {}]
  %s14 = inlined_call_operand.vmem [shape: f32[1,128], index: 14, kind: input, shape index: {}]
  %s15 = inlined_call_operand.hbm [shape: f32[128,128], index: 15, kind: input, shape index: {}]
  %s16 = inlined_call_operand.vmem [shape: f32[1,128], index: 16, kind: input, shape index: {}]
  %s17 = inlined_call_operand.hbm [shape: f32[8,128], index: 17, kind: output, shape index: {}]
  %s18 = sld [smem:[#allocation0]]
  $region118: #{tpu_custom_call.1} parent=0
    _
  %s20 = ssub.s32 1, %s18
  %s21 = scalar_select 0, %s20, %s18
  $region1: #{tpu_custom_call.1} parent=0
    #allocation2 [shape = 'u8[4096]{0}', space=vmem, size = 0x1000, scoped, tag = 'input window, operand 0, single buffered']
    #allocation3 [shape = 's32[1]{0}', space=sflag, size = 0x4, scoped, tag = 'scoped memory for tpu_custom_call.1']
    #allocation4 [shape = 's32[1]{0}', space=sflag, size = 0x4, scoped, tag = 'scoped memory for tpu_custom_call.1']
    #allocation5 [shape = 'u8[4096]{0}', space=vmem, size = 0x1000, scoped, tag = 'input window, operand 1, single buffered']
    #allocation6 [shape = 's32[1]{0}', space=sflag, size = 0x4, scoped, tag = 'scoped memory for tpu_custom_call.1']
    #allocation7 [shape = 'u8[4096]{0}', space=vmem, size = 0x1000, scoped, tag = 'input window, operand 2, single buffered']
    #allocation8 [shape = 'u8[512]{0}', space=vmem, size = 0x400, scoped, tag = 'input window, operand 4, single buffered']
    #allocation9 [shape = 's32[1]{0}', space=sflag, size = 0x4, scoped, tag = 'scoped memory for tpu_custom_call.1']
    #allocation10 [shape = 'u8[131072]{0}', space=vmem, size = 0x20000, scoped, tag = 'input window, operand 5, single buffered']
    #allocation11 [shape = 'u8[8192]{0}', space=vmem, size = 0x2000, scoped, tag = 'input window, operand 7, single buffered']
    #allocation12 [shape = 's32[1]{0}', space=sflag, size = 0x4, scoped, tag = 'scoped memory for tpu_custom_call.1']
    #allocation13 [shape = 'u8[8192]{0}', space=vmem, size = 0x2000, scoped, tag = 'input window, operand 8, single buffered']
    #allocation14 [shape = 'u8[65536]{0}', space=vmem, size = 0x10000, scoped, tag = 'input window, operand 11, single buffered']
    #allocation15 [shape = 's32[1]{0}', space=sflag, size = 0x4, scoped, tag = 'scoped memory for tpu_custom_call.1']
    #allocation16 [shape = 'u8[65536]{0}', space=vmem, size = 0x10000, scoped, tag = 'input window, operand 13, single buffered']
    #allocation17 [shape = 'u8[65536]{0}', space=vmem, size = 0x10000, scoped, tag = 'input window, operand 15, single buffered']
    #allocation18 [shape = 's32[1]{0}', space=sflag, size = 0x4, scoped, tag = 'scoped memory for tpu_custom_call.1']
    #allocation19 [shape = 'u8[4096]{0}', space=vmem, size = 0x1000, scoped, tag = 'output window, operand 0, single buffered']
    %22 = vsyncpa [#allocation3], 0
    %23 = vsyncpa [#allocation6], 0
    %24 = vsyncpa [#allocation9], 0
    %25 = vsyncpa [#allocation12], 0
    %26 = vsyncpa [#allocation15], 0
    %27 = vsyncpa [#allocation18], 0
    %28 = vsyncpa [#allocation4], 0
    // Predicated region
    $region2: #{tpu_custom_call.1} parent=1 // pred_check
      _
    $region3: #{tpu_custom_call.1} parent=1 // pred_check_branch
      %30 = sbr.rel (0) target = $region5
    $region4: #{tpu_custom_call.1} parent=1 // pred_region
      %s32 = ssub.s32 128, 128
      %33 = vsyncadd [#allocation3], %s32
      %s35 = sshll.u32 [#allocation2], 4
      %s36 = int_to_ptr.vmem [resolvable:$true] %s35
      %38 = dma.hbm_to_vmem [thread:$0]  %s0, 128, %s36, [#allocation3]
    $region5: #{tpu_custom_call.1} parent=1 // pred_fallthru
      _
    // Predicated region
    $region6: #{tpu_custom_call.1} parent=1 // pred_check
      _
    $region7: #{tpu_custom_call.1} parent=1 // pred_check_branch
      %40 = sbr.rel (0) target = $region9
    $region8: #{tpu_custom_call.1} parent=1 // pred_region
      %s42 = ssub.s32 128, 128
      %43 = vsyncadd [#allocation6], %s42
      %s45 = sshll.u32 [#allocation5], 4
      %s46 = int_to_ptr.vmem [resolvable:$true] %s45
      %48 = dma.hbm_to_vmem [thread:$0]  %s1, 128, %s46, [#allocation6]
    $region9: #{tpu_custom_call.1} parent=1 // pred_fallthru
      _
    // Predicated region
    $region10: #{tpu_custom_call.1} parent=1 // pred_check
      _
    $region11: #{tpu_custom_call.1} parent=1 // pred_check_branch
      %50 = sbr.rel (0) target = $region13
    $region12: #{tpu_custom_call.1} parent=1 // pred_region
      %s52 = ssub.s32 128, 128
      %53 = vsyncadd [#allocation6], %s52
      %s55 = sshll.u32 [#allocation7], 4
      %s56 = int_to_ptr.vmem [resolvable:$true] %s55
      %58 = dma.hbm_to_vmem [thread:$0]  %s2, 128, %s56, [#allocation6]
    $region13: #{tpu_custom_call.1} parent=1 // pred_fallthru
      _
    // Predicated region
    $region14: #{tpu_custom_call.1} parent=1 // pred_check
      _
    $region15: #{tpu_custom_call.1} parent=1 // pred_check_branch
      %60 = sbr.rel (0) target = $region17
    $region16: #{tpu_custom_call.1} parent=1 // pred_region
      _
    $region17: #{tpu_custom_call.1} parent=1 // pred_fallthru
      _
    // Predicated region
    $region18: #{tpu_custom_call.1} parent=1 // pred_check
      _
    $region19: #{tpu_custom_call.1} parent=1 // pred_check_branch
      %62 = sbr.rel (0) target = $region21
    $region20: #{tpu_custom_call.1} parent=1 // pred_region
      %s64 = ssub.s32 16, 16
      %65 = vsyncadd [#allocation9], %s64
      %s67 = sshll.u32 [#allocation8], 4
      %s68 = int_to_ptr.vmem [resolvable:$true] %s67
      %70 = dma.hbm_to_vmem [thread:$0]  %s4, 16, %s68, [#allocation9]
    $region21: #{tpu_custom_call.1} parent=1 // pred_fallthru
      _
    // Predicated region
    $region22: #{tpu_custom_call.1} parent=1 // pred_check
      _
    $region23: #{tpu_custom_call.1} parent=1 // pred_check_branch
      %72 = sbr.rel (0) target = $region25
    $region24: #{tpu_custom_call.1} parent=1 // pred_region
      %s74 = ssub.s32 4096, 4096
      %75 = vsyncadd [#allocation9], %s74
      %s76 = sshll.u32 [#allocation10], 4
      %s77 = int_to_ptr.vmem [resolvable:$true] %s76
      %82 = dma.hbm_to_vmem [thread:$0]  %s5, 4096, %s77, [#allocation9], 256, 256, 16
    $region25: #{tpu_custom_call.1} parent=1 // pred_fallthru
      _
    // Predicated region
    $region26: #{tpu_custom_call.1} parent=1 // pred_check
      _
    $region27: #{tpu_custom_call.1} parent=1 // pred_check_branch
      %84 = sbr.rel (0) target = $region29
    $region28: #{tpu_custom_call.1} parent=1 // pred_region
      _
    $region29: #{tpu_custom_call.1} parent=1 // pred_fallthru
      _
    // Predicated region
    $region30: #{tpu_custom_call.1} parent=1 // pred_check
      _
    $region31: #{tpu_custom_call.1} parent=1 // pred_check_branch
      %86 = sbr.rel (0) target = $region33
    $region32: #{tpu_custom_call.1} parent=1 // pred_region
      %s88 = ssub.s32 256, 256
      %89 = vsyncadd [#allocation12], %s88
      %s90 = sshll.u32 [#allocation11], 4
      %s91 = int_to_ptr.vmem [resolvable:$true] %s90
      %96 = dma.hbm_to_vmem [thread:$0]  %s7, 256, %s91, [#allocation12], 128, 128, 8
    $region33: #{tpu_custom_call.1} parent=1 // pred_fallthru
      _
    // Predicated region
    $region34: #{tpu_custom_call.1} parent=1 // pred_check
      _
    $region35: #{tpu_custom_call.1} parent=1 // pred_check_branch
      %98 = sbr.rel (0) target = $region37
    $region36: #{tpu_custom_call.1} parent=1 // pred_region
      %s100 = ssub.s32 256, 256
      %101 = vsyncadd [#allocation12], %s100
      %s102 = sshll.u32 [#allocation13], 4
      %s103 = int_to_ptr.vmem [resolvable:$true] %s102
      %108 = dma.hbm_to_vmem [thread:$0]  %s8, 256, %s103, [#allocation12], 128, 128, 8
    $region37: #{tpu_custom_call.1} parent=1 // pred_fallthru
      _
    // Predicated region
    $region38: #{tpu_custom_call.1} parent=1 // pred_check
      _
    $region39: #{tpu_custom_call.1} parent=1 // pred_check_branch
      %110 = sbr.rel (0) target = $region41
    $region40: #{tpu_custom_call.1} parent=1 // pred_region
      _
    $region41: #{tpu_custom_call.1} parent=1 // pred_fallthru
      _
    // Predicated region
    $region42: #{tpu_custom_call.1} parent=1 // pred_check
      _
    $region43: #{tpu_custom_call.1} parent=1 // pred_check_branch
      %112 = sbr.rel (0) target = $region45
    $region44: #{tpu_custom_call.1} parent=1 // pred_region
      _
    $region45: #{tpu_custom_call.1} parent=1 // pred_fallthru
      _
    // Predicated region
    $region46: #{tpu_custom_call.1} parent=1 // pred_check
      _
    $region47: #{tpu_custom_call.1} parent=1 // pred_check_branch
      %114 = sbr.rel (0) target = $region49
    $region48: #{tpu_custom_call.1} parent=1 // pred_region
      %s116 = ssub.s32 2048, 2048
      %117 = vsyncadd [#allocation15], %s116
      %s118 = sshll.u32 [#allocation14], 4
      %s119 = int_to_ptr.vmem [resolvable:$true] %s118
      %124 = dma.hbm_to_vmem [thread:$0]  %s11, 2048, %s119, [#allocation15], 128, 128, 8
    $region49: #{tpu_custom_call.1} parent=1 // pred_fallthru
      _
    // Predicated region
    $region50: #{tpu_custom_call.1} parent=1 // pred_check
      _
    $region51: #{tpu_custom_call.1} parent=1 // pred_check_branch
      %126 = sbr.rel (0) target = $region53
    $region52: #{tpu_custom_call.1} parent=1 // pred_region
      _
    $region53: #{tpu_custom_call.1} parent=1 // pred_fallthru
      _
    // Predicated region
    $region54: #{tpu_custom_call.1} parent=1 // pred_check
      _
    $region55: #{tpu_custom_call.1} parent=1 // pred_check_branch
      %128 = sbr.rel (0) target = $region57
    $region56: #{tpu_custom_call.1} parent=1 // pred_region
      %s130 = ssub.s32 2048, 2048
      %131 = vsyncadd [#allocation15], %s130
      %s132 = sshll.u32 [#allocation16], 4
      %s133 = int_to_ptr.vmem [resolvable:$true] %s132
      %138 = dma.hbm_to_vmem [thread:$0]  %s13, 2048, %s133, [#allocation15], 128, 128, 8
    $region57: #{tpu_custom_call.1} parent=1 // pred_fallthru
      _
    // Predicated region
    $region58: #{tpu_custom_call.1} parent=1 // pred_check
      _
    $region59: #{tpu_custom_call.1} parent=1 // pred_check_branch
      %140 = sbr.rel (0) target = $region61
    $region60: #{tpu_custom_call.1} parent=1 // pred_region
      _
    $region61: #{tpu_custom_call.1} parent=1 // pred_fallthru
      _
    // Predicated region
    $region62: #{tpu_custom_call.1} parent=1 // pred_check
      _
    $region63: #{tpu_custom_call.1} parent=1 // pred_check_branch
      %142 = sbr.rel (0) target = $region65
    $region64: #{tpu_custom_call.1} parent=1 // pred_region
      %s144 = ssub.s32 2048, 2048
      %145 = vsyncadd [#allocation18], %s144
      %s146 = sshll.u32 [#allocation17], 4
      %s147 = int_to_ptr.vmem [resolvable:$true] %s146
      %152 = dma.hbm_to_vmem [thread:$0]  %s15, 2048, %s147, [#allocation18], 128, 128, 8
    $region65: #{tpu_custom_call.1} parent=1 // pred_fallthru
      _
    // Predicated region
    $region66: #{tpu_custom_call.1} parent=1 // pred_check
      _
    $region67: #{tpu_custom_call.1} parent=1 // pred_check_branch
      %154 = sbr.rel (0) target = $region69
    $region68: #{tpu_custom_call.1} parent=1 // pred_region
      _
    $region69: #{tpu_custom_call.1} parent=1 // pred_fallthru
      _
    // Predicated region
    $region70: #{tpu_custom_call.1} parent=1 // pred_check
      _
    $region71: #{tpu_custom_call.1} parent=1 // pred_check_branch
      %156 = sbr.rel (0) target = $region73
    $region72: #{tpu_custom_call.1} parent=1 // pred_region
      %157 = dma.done [#allocation3], 128
    $region73: #{tpu_custom_call.1} parent=1 // pred_fallthru
      _
    // Predicated region
    $region74: #{tpu_custom_call.1} parent=1 // pred_check
      _
    $region75: #{tpu_custom_call.1} parent=1 // pred_check_branch
      %159 = sbr.rel (0) target = $region77
    $region76: #{tpu_custom_call.1} parent=1 // pred_region
      %160 = dma.done [#allocation6], 128
    $region77: #{tpu_custom_call.1} parent=1 // pred_fallthru
      _
    // Predicated region
    $region78: #{tpu_custom_call.1} parent=1 // pred_check
      _
    $region79: #{tpu_custom_call.1} parent=1 // pred_check_branch
      %162 = sbr.rel (0) target = $region81
    $region80: #{tpu_custom_call.1} parent=1 // pred_region
      %163 = dma.done [#allocation6], 128
    $region81: #{tpu_custom_call.1} parent=1 // pred_fallthru
      _
    // Predicated region
    $region82: #{tpu_custom_call.1} parent=1 // pred_check
      _
    $region83: #{tpu_custom_call.1} parent=1 // pred_check_branch
      %165 = sbr.rel (0) target = $region85
    $region84: #{tpu_custom_call.1} parent=1 // pred_region
      %166 = dma.done [#allocation9], 16
    $region85: #{tpu_custom_call.1} parent=1 // pred_fallthru
      _
    // Predicated region
    $region86: #{tpu_custom_call.1} parent=1 // pred_check
      _
    $region87: #{tpu_custom_call.1} parent=1 // pred_check_branch
      %168 = sbr.rel (0) target = $region89
    $region88: #{tpu_custom_call.1} parent=1 // pred_region
      %169 = dma.done [#allocation9], 4096
    $region89: #{tpu_custom_call.1} parent=1 // pred_fallthru
      _
    // Predicated region
    $region90: #{tpu_custom_call.1} parent=1 // pred_check
      _
    $region91: #{tpu_custom_call.1} parent=1 // pred_check_branch
      %171 = sbr.rel (0) target = $region93
    $region92: #{tpu_custom_call.1} parent=1 // pred_region
      %172 = dma.done [#allocation12], 256
    $region93: #{tpu_custom_call.1} parent=1 // pred_fallthru
      _
    // Predicated region
    $region94: #{tpu_custom_call.1} parent=1 // pred_check
      _
    $region95: #{tpu_custom_call.1} parent=1 // pred_check_branch
      %174 = sbr.rel (0) target = $region97
    $region96: #{tpu_custom_call.1} parent=1 // pred_region
      %175 = dma.done [#allocation12], 256
    $region97: #{tpu_custom_call.1} parent=1 // pred_fallthru
      _
    // Predicated region
    $region98: #{tpu_custom_call.1} parent=1 // pred_check
      _
    $region99: #{tpu_custom_call.1} parent=1 // pred_check_branch
      %177 = sbr.rel (0) target = $region101
    $region100: #{tpu_custom_call.1} parent=1 // pred_region
      %178 = dma.done [#allocation15], 2048
    $region101: #{tpu_custom_call.1} parent=1 // pred_fallthru
      _
    // Predicated region
    $region102: #{tpu_custom_call.1} parent=1 // pred_check
      _
    $region103: #{tpu_custom_call.1} parent=1 // pred_check_branch
      %180 = sbr.rel (0) target = $region105
    $region104: #{tpu_custom_call.1} parent=1 // pred_region
      %181 = dma.done [#allocation15], 2048
    $region105: #{tpu_custom_call.1} parent=1 // pred_fallthru
      _
    // Predicated region
    $region106: #{tpu_custom_call.1} parent=1 // pred_check
      _
    $region107: #{tpu_custom_call.1} parent=1 // pred_check_branch
      %183 = sbr.rel (0) target = $region109
    $region108: #{tpu_custom_call.1} parent=1 // pred_region
      %184 = dma.done [#allocation18], 2048
    $region109: #{tpu_custom_call.1} parent=1 // pred_fallthru
      _
    %v186 = vld [vmem:[#allocation2] sm:$0xff]
    %v187 = vld [vmem:[#allocation5] sm:$0xff]
    %v188 = vld [vmem:[%s3] sm:$0xff]
    %v189 = vld [vmem:[%s3 + $0x8] sm:$0xff]
    %v190 = vld [vmem:[%s3 + $0x10] sm:$0xff]
    %v191 = vld [vmem:[%s3 + $0x18] sm:$0xff]
    %v192 = vld [vmem:[%s3 + $0x20] sm:$0xff]
    %v193 = vld [vmem:[%s3 + $0x28] sm:$0xff]
    %v194 = vld [vmem:[%s3 + $0x30] sm:$0xff]
    %v195 = vld [vmem:[%s3 + $0x38] sm:$0xff]
    %v196 = vld [vmem:[%s3 + $0x40] sm:$0xff]
    %v197 = vld [vmem:[%s3 + $0x48] sm:$0xff]
    %v198 = vld [vmem:[%s3 + $0x50] sm:$0xff]
    %v199 = vld [vmem:[%s3 + $0x58] sm:$0xff]
    %v200 = vld [vmem:[%s3 + $0x60] sm:$0xff]
    %v201 = vld [vmem:[%s3 + $0x68] sm:$0xff]
    %v202 = vld [vmem:[%s3 + $0x70] sm:$0xff]
    %v203 = vld [vmem:[%s3 + $0x78] sm:$0xff]
    %v204 = vpack.c.bf16 %v186, %v186
    %v205 = vpack.c.bf16 %v189, %v188
    %v206 = vpack.c.bf16 %v191, %v190
    %v207 = vpack.c.bf16 %v193, %v192
    %v208 = vpack.c.bf16 %v195, %v194
    %v209 = vpack.c.bf16 %v197, %v196
    %v210 = vpack.c.bf16 %v199, %v198
    %v211 = vpack.c.bf16 %v201, %v200
    %v212 = vpack.c.bf16 %v203, %v202
    %v213 = vld [vmem:[#allocation8] sm:$0x1]
    %v215 = vlaneseq
    %v216 = vshrl.u32 %v215, 7
    %v217 = vsub.s32 0, %v216
    %v218 = vrot.slane %v213, %v217
    %220 = vmatprep.subr.bf16.mxu0 0
    %221 = vmatpush1.bf16.msra.mxu0 %v205
    %222 = vmatprep.subr.bf16.mxu0 0
    %223 = vmatpush1.bf16.msra.mxu0 %v206
    %224 = vmatprep.subr.bf16.mxu0 0
    %225 = vmatpush1.bf16.msra.mxu0 %v207
    %226 = vmatprep.subr.bf16.mxu0 0
    %227 = vmatpush1.bf16.msra.mxu0 %v208
    %228 = vmatprep.subr.bf16.mxu0 0
    %229 = vmatpush1.bf16.msra.mxu0 %v209
    %230 = vmatprep.subr.bf16.mxu0 0
    %231 = vmatpush1.bf16.msra.mxu0 %v210
    %232 = vmatprep.subr.bf16.mxu0 0
    %233 = vmatpush1.bf16.msra.mxu0 %v211
    %234 = vmatprep.subr.bf16.mxu0 0
    %235 = vmatpush1.bf16.msra.mxu0 %v212
    %236 = vmatprep.subr.bf16.mxu0 0
    %237 = vmatpush1.bf16.msra.mxu0 0
    %238 = vmatprep.subr.bf16.mxu0 0
    %239 = vmatpush1.bf16.msra.mxu0 0
    %240 = vmatprep.subr.bf16.mxu0 0
    %241 = vmatpush1.bf16.msra.mxu0 0
    %242 = vmatprep.subr.bf16.mxu0 0
    %243 = vmatpush1.bf16.msra.mxu0 0
    %244 = vmatprep.subr.bf16.mxu0 0
    %245 = vmatpush1.bf16.msra.mxu0 0
    %246 = vmatprep.subr.bf16.mxu0 0
    %247 = vmatpush1.bf16.msra.mxu0 0
    %248 = vmatprep.subr.bf16.mxu0 0
    %249 = vmatpush1.bf16.msra.mxu0 0
    %250 = vmatprep.subr.bf16.mxu0 0
    %251 = vmatpush1.bf16.msra.mxu0 0
    %252 = vmatprep.mubr.bf16.mxu0 0
    %253 = vmatmul.mubr.bf16.gmra.mrb[0].mxu0 %v204
    %v254 = vpop.f32.mrb[0].mxu0
    %v255 = vadd.f32 %v218, %v254
    %v256 = vpop.f32.mrb[0].mxu0
    %v257 = vpop.f32.mrb[0].mxu0
    %v258 = vpop.f32.mrb[0].mxu0
    %259 = vdwg.mxu0
    %v260 = vld [vmem:[#allocation10] sm:$0xff]
    %v261 = vld [vmem:[#allocation10 + $0x8] sm:$0xff]
    %v262 = vld [vmem:[#allocation10 + $0x10] sm:$0xff]
    %v263 = vld [vmem:[#allocation10 + $0x18] sm:$0xff]
    %v264 = vld [vmem:[#allocation10 + $0x20] sm:$0xff]
    %v265 = vld [vmem:[#allocation10 + $0x28] sm:$0xff]
    %v266 = vld [vmem:[#allocation10 + $0x30] sm:$0xff]
    %v267 = vld [vmem:[#allocation10 + $0x38] sm:$0xff]
    %v268 = vld [vmem:[#allocation10 + $0x40] sm:$0xff]
    %v269 = vld [vmem:[#allocation10 + $0x48] sm:$0xff]
    %v270 = vld [vmem:[#allocation10 + $0x50] sm:$0xff]
    %v271 = vld [vmem:[#allocation10 + $0x58] sm:$0xff]
    %v272 = vld [vmem:[#allocation10 + $0x60] sm:$0xff]
    %v273 = vld [vmem:[#allocation10 + $0x68] sm:$0xff]
    %v274 = vld [vmem:[#allocation10 + $0x70] sm:$0xff]
    %v275 = vld [vmem:[#allocation10 + $0x78] sm:$0xff]
    %v276 = vld [vmem:[#allocation10 + $0x80] sm:$0xff]
    %v277 = vld [vmem:[#allocation10 + $0x88] sm:$0xff]
    %v278 = vld [vmem:[#allocation10 + $0x90] sm:$0xff]
    %v279 = vld [vmem:[#allocation10 + $0x98] sm:$0xff]
    %v280 = vld [vmem:[#allocation10 + $0xa0] sm:$0xff]
    %v281 = vld [vmem:[#allocation10 + $0xa8] sm:$0xff]
    %v282 = vld [vmem:[#allocation10 + $0xb0] sm:$0xff]
    %v283 = vld [vmem:[#allocation10 + $0xb8] sm:$0xff]
    %v284 = vld [vmem:[#allocation10 + $0xc0] sm:$0xff]
    %v285 = vld [vmem:[#allocation10 + $0xc8] sm:$0xff]
    %v286 = vld [vmem:[#allocation10 + $0xd0] sm:$0xff]
    %v287 = vld [vmem:[#allocation10 + $0xd8] sm:$0xff]
    %v288 = vld [vmem:[#allocation10 + $0xe0] sm:$0xff]
    %v289 = vld [vmem:[#allocation10 + $0xe8] sm:$0xff]
    %v290 = vld [vmem:[#allocation10 + $0xf0] sm:$0xff]
    %v291 = vld [vmem:[#allocation10 + $0xf8] sm:$0xff]
    %v292 = vpack.c.bf16 %v187, %v187
    %v293 = vpack.c.bf16 %v262, %v260
    %v294 = vpack.c.bf16 %v263, %v261
    %v295 = vpack.c.bf16 %v266, %v264
    %v296 = vpack.c.bf16 %v267, %v265
    %v297 = vpack.c.bf16 %v270, %v268
    %v298 = vpack.c.bf16 %v271, %v269
    %v299 = vpack.c.bf16 %v274, %v272
    %v300 = vpack.c.bf16 %v275, %v273
    %v301 = vpack.c.bf16 %v278, %v276
    %v302 = vpack.c.bf16 %v279, %v277
    %v303 = vpack.c.bf16 %v282, %v280
    %v304 = vpack.c.bf16 %v283, %v281
    %v305 = vpack.c.bf16 %v286, %v284
    %v306 = vpack.c.bf16 %v287, %v285
    %v307 = vpack.c.bf16 %v290, %v288
    %v308 = vpack.c.bf16 %v291, %v289
    %v309 = vld [vmem:[%s6] sm:$0x3]
    %v311 = vlaneseq
    %v312 = vshrl.u32 %v311, 7
    %v313 = vsub.s32 0, %v312
    %v314 = vrot.slane %v309, %v313
    %v315 = vlaneseq
    %v316 = vshrl.u32 %v315, 7
    %v317 = vsub.s32 1, %v316
    %v318 = vrot.slane %v309, %v317
    %321 = vmatprep.subr.bf16.mxu0 %v294
    %322 = vmatpush1.bf16.msra.mxu0 %v293
    %323 = vmatprep.subr.bf16.mxu0 %v296
    %324 = vmatpush1.bf16.msra.mxu0 %v295
    %325 = vmatprep.subr.bf16.mxu0 %v298
    %326 = vmatpush1.bf16.msra.mxu0 %v297
    %327 = vmatprep.subr.bf16.mxu0 %v300
    %328 = vmatpush1.bf16.msra.mxu0 %v299
    %329 = vmatprep.subr.bf16.mxu0 %v302
    %330 = vmatpush1.bf16.msra.mxu0 %v301
    %331 = vmatprep.subr.bf16.mxu0 %v304
    %332 = vmatpush1.bf16.msra.mxu0 %v303
    %333 = vmatprep.subr.bf16.mxu0 %v306
    %334 = vmatpush1.bf16.msra.mxu0 %v305
    %335 = vmatprep.subr.bf16.mxu0 %v308
    %336 = vmatpush1.bf16.msra.mxu0 %v307
    %337 = vmatprep.subr.bf16.mxu0 0
    %338 = vmatpush1.bf16.msra.mxu0 0
    %339 = vmatprep.subr.bf16.mxu0 0
    %340 = vmatpush1.bf16.msra.mxu0 0
    %341 = vmatprep.subr.bf16.mxu0 0
    %342 = vmatpush1.bf16.msra.mxu0 0
    %343 = vmatprep.subr.bf16.mxu0 0
    %344 = vmatpush1.bf16.msra.mxu0 0
    %345 = vmatprep.subr.bf16.mxu0 0
    %346 = vmatpush1.bf16.msra.mxu0 0
    %347 = vmatprep.subr.bf16.mxu0 0
    %348 = vmatpush1.bf16.msra.mxu0 0
    %349 = vmatprep.subr.bf16.mxu0 0
    %350 = vmatpush1.bf16.msra.mxu0 0
    %351 = vmatprep.subr.bf16.mxu0 0
    %352 = vmatpush1.bf16.msra.mxu0 0
    %353 = vmatprep.mubr.bf16.mxu0 0
    %354 = vmatmul.mubr.bf16.gmra.mrb[0].mxu0 %v292
    %v355 = vpop.f32.mrb[0].mxu0
    %v356 = vadd.f32 %v314, %v355
    %v357 = vpop.f32.mrb[0].mxu0
    %v358 = vadd.f32 %v318, %v357
    %v359 = vpop.f32.mrb[0].mxu0
    %v360 = vpop.f32.mrb[0].mxu0
    %361 = vdwg.mxu0
    %v362 = vld [vmem:[#allocation7] sm:$0xff]
    %v363 = vlaneseq
    %v364 = vand.u32 %v363, 127
    %v365 = vlaneseq
    %v366 = vshrl.u32 %v365, 7
    %v367 = vsub.s32 0, %v366
    %v368 = vrot.slane %v362, %v367
    %370 = vbcast.lane.b32.xlu0 %v368, 256
    %v371 = vpop.permute.xlu0 %370
    %v372 = vlaneseq
    %v373 = vshrl.u32 %v372, 7
    %v374 = vsub.s32 1, %v373
    %v375 = vrot.slane %v362, %v374
    %377 = vbcast.lane.b32.xlu0 %v375, 256
    %v378 = vpop.permute.xlu0 %377
    %v379 = vlaneseq
    %v380 = vshrl.u32 %v379, 7
    %v381 = vsub.s32 2, %v380
    %v382 = vrot.slane %v362, %v381
    %384 = vbcast.lane.b32.xlu0 %v382, 256
    %v385 = vpop.permute.xlu0 %384
    %v386 = vlaneseq
    %v387 = vshrl.u32 %v386, 7
    %v388 = vsub.s32 3, %v387
    %v389 = vrot.slane %v362, %v388
    %391 = vbcast.lane.b32.xlu0 %v389, 256
    %v392 = vpop.permute.xlu0 %391
    %v393 = vlaneseq
    %v394 = vshrl.u32 %v393, 7
    %v395 = vsub.s32 4, %v394
    %v396 = vrot.slane %v362, %v395
    %398 = vbcast.lane.b32.xlu0 %v396, 256
    %v399 = vpop.permute.xlu0 %398
    %v400 = vlaneseq
    %v401 = vshrl.u32 %v400, 7
    %v402 = vsub.s32 5, %v401
    %v403 = vrot.slane %v362, %v402
    %405 = vbcast.lane.b32.xlu0 %v403, 256
    %v406 = vpop.permute.xlu0 %405
    %v407 = vlaneseq
    %v408 = vshrl.u32 %v407, 7
    %v409 = vsub.s32 6, %v408
    %v410 = vrot.slane %v362, %v409
    %412 = vbcast.lane.b32.xlu0 %v410, 256
    %v413 = vpop.permute.xlu0 %412
    %v414 = vlaneseq
    %v415 = vshrl.u32 %v414, 7
    %v416 = vsub.s32 7, %v415
    %v417 = vrot.slane %v362, %v416
    %419 = vbcast.lane.b32.xlu0 %v417, 256
    %v420 = vpop.permute.xlu0 %419
    %vm421 = vcmp.eq.s32.totalorder %v371, %v364
    %vm422 = vcmp.eq.s32.totalorder %v378, %v364
    %vm423 = vcmp.eq.s32.totalorder %v385, %v364
    %vm424 = vcmp.eq.s32.totalorder %v392, %v364
    %vm425 = vcmp.eq.s32.totalorder %v399, %v364
    %vm426 = vcmp.eq.s32.totalorder %v406, %v364
    %vm427 = vcmp.eq.s32.totalorder %v413, %v364
    %vm428 = vcmp.eq.s32.totalorder %v420, %v364
    %v429 = vsel %vm421, 1, 0
    %v430 = vsel %vm422, 1, 0
    %v431 = vsel %vm423, 1, 0
    %v432 = vsel %vm424, 1, 0
    %v433 = vsel %vm425, 1, 0
    %v434 = vsel %vm426, 1, 0
    %v435 = vsel %vm427, 1, 0
    %v436 = vsel %vm428, 1, 0
    %v437 = vcvt.s32.f32 %v429
    %v438 = vcvt.s32.f32 %v430
    %v439 = vcvt.s32.f32 %v431
    %v440 = vcvt.s32.f32 %v432
    %v441 = vcvt.s32.f32 %v433
    %v442 = vcvt.s32.f32 %v434
    %v443 = vcvt.s32.f32 %v435
    %v444 = vcvt.s32.f32 %v436
    %v445 = vld [vmem:[#allocation11] sm:$0xff]
    %v446 = vld [vmem:[#allocation11 + $0x8] sm:$0xff]
    %v447 = vpack.c.bf16 %v438, %v437
    %v448 = vpack.c.bf16 %v440, %v439
    %v449 = vpack.c.bf16 %v442, %v441
    %v450 = vpack.c.bf16 %v444, %v443
    %v451 = vpack.c.bf16 %v446, %v445
    %vm452 = vcmask 130048
    %v454 = vsel %vm452, %v447, 0
    %v457 = vsel %vm452, %v448, 0
    %v460 = vsel %vm452, %v449, 0
    %v463 = vsel %vm452, %v450, 0
    %465 = vmatprep.subr.bf16.mxu0 0
    %466 = vmatpush1.bf16.msra.mxu0 %v451
    %467 = vmatprep.subr.bf16.mxu0 0
    %468 = vmatpush1.bf16.msra.mxu0 0
    %469 = vmatprep.subr.bf16.mxu0 0
    %470 = vmatpush1.bf16.msra.mxu0 0
    %471 = vmatprep.subr.bf16.mxu0 0
    %472 = vmatpush1.bf16.msra.mxu0 0
    %473 = vmatprep.subr.bf16.mxu0 0
    %474 = vmatpush1.bf16.msra.mxu0 0
    %475 = vmatprep.subr.bf16.mxu0 0
    %476 = vmatpush1.bf16.msra.mxu0 0
    %477 = vmatprep.subr.bf16.mxu0 0
    %478 = vmatpush1.bf16.msra.mxu0 0
    %479 = vmatprep.subr.bf16.mxu0 0
    %480 = vmatpush1.bf16.msra.mxu0 0
    %481 = vmatprep.subr.bf16.mxu0 0
    %482 = vmatpush1.bf16.msra.mxu0 0
    %483 = vmatprep.subr.bf16.mxu0 0
    %484 = vmatpush1.bf16.msra.mxu0 0
    %485 = vmatprep.subr.bf16.mxu0 0
    %486 = vmatpush1.bf16.msra.mxu0 0
    %487 = vmatprep.subr.bf16.mxu0 0
    %488 = vmatpush1.bf16.msra.mxu0 0
    %489 = vmatprep.subr.bf16.mxu0 0
    %490 = vmatpush1.bf16.msra.mxu0 0
    %491 = vmatprep.subr.bf16.mxu0 0
    %492 = vmatpush1.bf16.msra.mxu0 0
    %493 = vmatprep.subr.bf16.mxu0 0
    %494 = vmatpush1.bf16.msra.mxu0 0
    %495 = vmatprep.subr.bf16.mxu0 0
    %496 = vmatpush1.bf16.msra.mxu0 0
    %497 = vmatprep.mubr.bf16.mxu0 0
    %498 = vmatmul.mubr.bf16.gmra.mrb[0].mxu0 %v454
    %v499 = vpop.f32.mrb[0].mxu0
    %v500 = vadd.f32 0.0, %v499
    %v501 = vpop.f32.mrb[0].mxu0
    %v502 = vpop.f32.mrb[0].mxu0
    %v503 = vadd.f32 0.0, %v502
    %v504 = vpop.f32.mrb[0].mxu0
    %505 = vmatprep.mubr.bf16.mxu0 0
    %506 = vmatmul.mubr.bf16.gmra.mrb[0].mxu0 %v457
    %v507 = vpop.f32.mrb[0].mxu0
    %v508 = vadd.f32 0.0, %v507
    %v509 = vpop.f32.mrb[0].mxu0
    %v510 = vpop.f32.mrb[0].mxu0
    %v511 = vadd.f32 0.0, %v510
    %v512 = vpop.f32.mrb[0].mxu0
    %513 = vmatprep.mubr.bf16.mxu0 0
    %514 = vmatmul.mubr.bf16.gmra.mrb[0].mxu0 %v460
    %v515 = vpop.f32.mrb[0].mxu0
    %v516 = vadd.f32 0.0, %v515
    %v517 = vpop.f32.mrb[0].mxu0
    %v518 = vpop.f32.mrb[0].mxu0
    %v519 = vadd.f32 0.0, %v518
    %v520 = vpop.f32.mrb[0].mxu0
    %521 = vmatprep.mubr.bf16.mxu0 0
    %522 = vmatmul.mubr.bf16.gmra.mrb[0].mxu0 %v463
    %v523 = vpop.f32.mrb[0].mxu0
    %v524 = vadd.f32 0.0, %v523
    %v525 = vpop.f32.mrb[0].mxu0
    %v526 = vpop.f32.mrb[0].mxu0
    %v527 = vadd.f32 0.0, %v526
    %v528 = vpop.f32.mrb[0].mxu0
    %529 = vdwg.mxu0
    %v530 = vld [vmem:[#allocation13] sm:$0xff]
    %v531 = vld [vmem:[#allocation13 + $0x8] sm:$0xff]
    %v532 = vpack.c.bf16 %v531, %v530
    %533 = vmatprep.subr.bf16.mxu0 0
    %534 = vmatpush1.bf16.msra.mxu0 %v532
    %535 = vmatprep.subr.bf16.mxu0 0
    %536 = vmatpush1.bf16.msra.mxu0 0
    %537 = vmatprep.subr.bf16.mxu0 0
    %538 = vmatpush1.bf16.msra.mxu0 0
    %539 = vmatprep.subr.bf16.mxu0 0
    %540 = vmatpush1.bf16.msra.mxu0 0
    %541 = vmatprep.subr.bf16.mxu0 0
    %542 = vmatpush1.bf16.msra.mxu0 0
    %543 = vmatprep.subr.bf16.mxu0 0
    %544 = vmatpush1.bf16.msra.mxu0 0
    %545 = vmatprep.subr.bf16.mxu0 0
    %546 = vmatpush1.bf16.msra.mxu0 0
    %547 = vmatprep.subr.bf16.mxu0 0
    %548 = vmatpush1.bf16.msra.mxu0 0
    %549 = vmatprep.subr.bf16.mxu0 0
    %550 = vmatpush1.bf16.msra.mxu0 0
    %551 = vmatprep.subr.bf16.mxu0 0
    %552 = vmatpush1.bf16.msra.mxu0 0
    %553 = vmatprep.subr.bf16.mxu0 0
    %554 = vmatpush1.bf16.msra.mxu0 0
    %555 = vmatprep.subr.bf16.mxu0 0
    %556 = vmatpush1.bf16.msra.mxu0 0
    %557 = vmatprep.subr.bf16.mxu0 0
    %558 = vmatpush1.bf16.msra.mxu0 0
    %559 = vmatprep.subr.bf16.mxu0 0
    %560 = vmatpush1.bf16.msra.mxu0 0
    %561 = vmatprep.subr.bf16.mxu0 0
    %562 = vmatpush1.bf16.msra.mxu0 0
    %563 = vmatprep.subr.bf16.mxu0 0
    %564 = vmatpush1.bf16.msra.mxu0 0
    %565 = vmatprep.mubr.bf16.mxu0 0
    %566 = vmatmul.mubr.bf16.gmra.mrb[0].mxu0 %v454
    %v567 = vpop.f32.mrb[0].mxu0
    %v568 = vadd.f32 0.0, %v567
    %v569 = vpop.f32.mrb[0].mxu0
    %v570 = vpop.f32.mrb[0].mxu0
    %v571 = vadd.f32 0.0, %v570
    %v572 = vpop.f32.mrb[0].mxu0
    %573 = vmatprep.mubr.bf16.mxu0 0
    %574 = vmatmul.mubr.bf16.gmra.mrb[0].mxu0 %v457
    %v575 = vpop.f32.mrb[0].mxu0
    %v576 = vadd.f32 0.0, %v575
    %v577 = vpop.f32.mrb[0].mxu0
    %v578 = vpop.f32.mrb[0].mxu0
    %v579 = vadd.f32 0.0, %v578
    %v580 = vpop.f32.mrb[0].mxu0
    %581 = vmatprep.mubr.bf16.mxu0 0
    %582 = vmatmul.mubr.bf16.gmra.mrb[0].mxu0 %v460
    %v583 = vpop.f32.mrb[0].mxu0
    %v584 = vadd.f32 0.0, %v583
    %v585 = vpop.f32.mrb[0].mxu0
    %v586 = vpop.f32.mrb[0].mxu0
    %v587 = vadd.f32 0.0, %v586
    %v588 = vpop.f32.mrb[0].mxu0
    %589 = vmatprep.mubr.bf16.mxu0 0
    %590 = vmatmul.mubr.bf16.gmra.mrb[0].mxu0 %v463
    %v591 = vpop.f32.mrb[0].mxu0
    %v592 = vadd.f32 0.0, %v591
    %v593 = vpop.f32.mrb[0].mxu0
    %v594 = vpop.f32.mrb[0].mxu0
    %v595 = vadd.f32 0.0, %v594
    %v596 = vpop.f32.mrb[0].mxu0
    %597 = vdwg.mxu0
    %v599 = vcombine.high %v255, %v255
    %v601 = vunpack.c.l.s4 1966171168
    %v602 = vunpack.c.0.s8 %v601
    %v603 = vlaneseq
    %v604 = vshrl.u32 %v603, 7
    %v605 = vsub.s32 %v602, %v604
    %v606 = vrot.slane %v255, %v605
    %v608 = vunpack.c.l.s4 1966171168
    %v609 = vunpack.c.0.s8 %v608
    %v610 = vlaneseq
    %v611 = vshrl.u32 %v610, 7
    %v612 = vsub.s32 %v609, %v611
    %v613 = vrot.slane %v599, %v612
    %v614 = vcombine.high %v606, %v606
    %v615 = vcombine.high %v613, %v613
    %v617 = vunpack.c.l.s4 1966171168
    %v618 = vunpack.c.0.s8 %v617
    %v619 = vlaneseq
    %v620 = vshrl.u32 %v619, 7
    %v621 = vsub.s32 %v618, %v620
    %v622 = vrot.slane %v606, %v621
    %v624 = vunpack.c.l.s4 1966171168
    %v625 = vunpack.c.0.s8 %v624
    %v626 = vlaneseq
    %v627 = vshrl.u32 %v626, 7
    %v628 = vsub.s32 %v625, %v627
    %v629 = vrot.slane %v613, %v628
    %v631 = vunpack.c.l.s4 1966171168
    %v632 = vunpack.c.0.s8 %v631
    %v633 = vlaneseq
    %v634 = vshrl.u32 %v633, 7
    %v635 = vsub.s32 %v632, %v634
    %v636 = vrot.slane %v614, %v635
    %v638 = vunpack.c.l.s4 1966171168
    %v639 = vunpack.c.0.s8 %v638
    %v640 = vlaneseq
    %v641 = vshrl.u32 %v640, 7
    %v642 = vsub.s32 %v639, %v641
    %v643 = vrot.slane %v615, %v642
    %v644 = vcombine.high %v622, %v622
    %v645 = vcombine.high %v629, %v629
    %v646 = vcombine.high %v636, %v636
    %v647 = vcombine.high %v643, %v643
    %v648 = vadd.f32 %v356, %v500
    %v649 = vadd.f32 %v356, %v503
    %v650 = vadd.f32 %v356, %v508
    %v651 = vadd.f32 %v356, %v511
    %v652 = vadd.f32 %v356, %v516
    %v653 = vadd.f32 %v356, %v519
    %v654 = vadd.f32 %v356, %v524
    %v655 = vadd.f32 %v356, %v527
    %v656 = vlaneseq
    %v657 = vshrl.u32 %v656, 7
    %v658 = vsub.s32 0, %v657
    %v659 = vrot.slane %v622, %v658
    %v660 = vlaneseq
    %v661 = vshrl.u32 %v660, 7
    %v662 = vsub.s32 0, %v661
    %v663 = vrot.slane %v636, %v662
    %v664 = vlaneseq
    %v665 = vshrl.u32 %v664, 7
    %v666 = vsub.s32 0, %v665
    %v667 = vrot.slane %v644, %v666
    %v668 = vlaneseq
    %v669 = vshrl.u32 %v668, 7
    %v670 = vsub.s32 0, %v669
    %v671 = vrot.slane %v646, %v670
    %v672 = vlaneseq
    %v673 = vshrl.u32 %v672, 7
    %v674 = vsub.s32 0, %v673
    %v675 = vrot.slane %v629, %v674
    %v676 = vlaneseq
    %v677 = vshrl.u32 %v676, 7
    %v678 = vsub.s32 0, %v677
    %v679 = vrot.slane %v643, %v678
    %v680 = vlaneseq
    %v681 = vshrl.u32 %v680, 7
    %v682 = vsub.s32 0, %v681
    %v683 = vrot.slane %v645, %v682
    %v684 = vlaneseq
    %v685 = vshrl.u32 %v684, 7
    %v686 = vsub.s32 0, %v685
    %v687 = vrot.slane %v647, %v686
    %v696 = vmul.f32 %v659, %v648
    %v697 = vmul.f32 %v663, %v649
    %v698 = vmul.f32 %v667, %v650
    %v699 = vmul.f32 %v671, %v651
    %v700 = vmul.f32 %v675, %v652
    %v701 = vmul.f32 %v679, %v653
    %v702 = vmul.f32 %v683, %v654
    %v703 = vmul.f32 %v687, %v655
    %v704 = vld [vmem:[%s9] sm:$0xff]
    %v705 = vld [vmem:[%s9 + $0x8] sm:$0xff]
    %v706 = vld [vmem:[%s9 + $0x10] sm:$0xff]
    %v707 = vld [vmem:[%s9 + $0x18] sm:$0xff]
    %v708 = vld [vmem:[%s9 + $0x20] sm:$0xff]
    %v709 = vld [vmem:[%s9 + $0x28] sm:$0xff]
    %v710 = vld [vmem:[%s9 + $0x30] sm:$0xff]
    %v711 = vld [vmem:[%s9 + $0x38] sm:$0xff]
    %v712 = vld [vmem:[%s9 + $0x40] sm:$0xff]
    %v713 = vld [vmem:[%s9 + $0x48] sm:$0xff]
    %v714 = vld [vmem:[%s9 + $0x50] sm:$0xff]
    %v715 = vld [vmem:[%s9 + $0x58] sm:$0xff]
    %v716 = vld [vmem:[%s9 + $0x60] sm:$0xff]
    %v717 = vld [vmem:[%s9 + $0x68] sm:$0xff]
    %v718 = vld [vmem:[%s9 + $0x70] sm:$0xff]
    %v719 = vld [vmem:[%s9 + $0x78] sm:$0xff]
    %v720 = vpack.c.bf16 %v697, %v696
    %v721 = vpack.c.bf16 %v699, %v698
    %v722 = vpack.c.bf16 %v701, %v700
    %v723 = vpack.c.bf16 %v703, %v702
    %v724 = vpack.c.bf16 %v705, %v704
    %v725 = vpack.c.bf16 %v707, %v706
    %v726 = vpack.c.bf16 %v709, %v708
    %v727 = vpack.c.bf16 %v711, %v710
    %v728 = vpack.c.bf16 %v713, %v712
    %v729 = vpack.c.bf16 %v715, %v714
    %v730 = vpack.c.bf16 %v717, %v716
    %v731 = vpack.c.bf16 %v719, %v718
    %732 = vmatprep.subr.bf16.mxu0 0
    %733 = vmatpush1.bf16.msra.mxu0 %v724
    %734 = vmatprep.subr.bf16.mxu0 0
    %735 = vmatpush1.bf16.msra.mxu0 %v725
    %736 = vmatprep.subr.bf16.mxu0 0
    %737 = vmatpush1.bf16.msra.mxu0 %v726
    %738 = vmatprep.subr.bf16.mxu0 0
    %739 = vmatpush1.bf16.msra.mxu0 %v727
    %740 = vmatprep.subr.bf16.mxu0 0
    %741 = vmatpush1.bf16.msra.mxu0 %v728
    %742 = vmatprep.subr.bf16.mxu0 0
    %743 = vmatpush1.bf16.msra.mxu0 %v729
    %744 = vmatprep.subr.bf16.mxu0 0
    %745 = vmatpush1.bf16.msra.mxu0 %v730
    %746 = vmatprep.subr.bf16.mxu0 0
    %747 = vmatpush1.bf16.msra.mxu0 %v731
    %748 = vmatprep.subr.bf16.mxu0 0
    %749 = vmatpush1.bf16.msra.mxu0 0
    %750 = vmatprep.subr.bf16.mxu0 0
    %751 = vmatpush1.bf16.msra.mxu0 0
    %752 = vmatprep.subr.bf16.mxu0 0
    %753 = vmatpush1.bf16.msra.mxu0 0
    %754 = vmatprep.subr.bf16.mxu0 0
    %755 = vmatpush1.bf16.msra.mxu0 0
    %756 = vmatprep.subr.bf16.mxu0 0
    %757 = vmatpush1.bf16.msra.mxu0 0
    %758 = vmatprep.subr.bf16.mxu0 0
    %759 = vmatpush1.bf16.msra.mxu0 0
    %760 = vmatprep.subr.bf16.mxu0 0
    %761 = vmatpush1.bf16.msra.mxu0 0
    %762 = vmatprep.subr.bf16.mxu0 0
    %763 = vmatpush1.bf16.msra.mxu0 0
    %764 = vmatprep.mubr.bf16.mxu0 0
    %765 = vmatmul.mubr.bf16.gmra.mrb[0].mxu0 %v720
    %v766 = vpop.f32.mrb[0].mxu0
    %v767 = vadd.f32 0.0, %v766
    %v768 = vpop.f32.mrb[0].mxu0
    %v769 = vpop.f32.mrb[0].mxu0
    %v770 = vadd.f32 0.0, %v769
    %v771 = vpop.f32.mrb[0].mxu0
    %772 = vmatprep.mubr.bf16.mxu0 0
    %773 = vmatmul.mubr.bf16.gmra.mrb[0].mxu0 %v721
    %v774 = vpop.f32.mrb[0].mxu0
    %v775 = vadd.f32 0.0, %v774
    %v776 = vpop.f32.mrb[0].mxu0
    %v777 = vpop.f32.mrb[0].mxu0
    %v778 = vadd.f32 0.0, %v777
    %v779 = vpop.f32.mrb[0].mxu0
    %780 = vmatprep.mubr.bf16.mxu0 0
    %781 = vmatmul.mubr.bf16.gmra.mrb[0].mxu0 %v722
    %v782 = vpop.f32.mrb[0].mxu0
    %v783 = vadd.f32 0.0, %v782
    %v784 = vpop.f32.mrb[0].mxu0
    %v785 = vpop.f32.mrb[0].mxu0
    %v786 = vadd.f32 0.0, %v785
    %v787 = vpop.f32.mrb[0].mxu0
    %788 = vmatprep.mubr.bf16.mxu0 0
    %789 = vmatmul.mubr.bf16.gmra.mrb[0].mxu0 %v723
    %v790 = vpop.f32.mrb[0].mxu0
    %v791 = vadd.f32 0.0, %v790
    %v792 = vpop.f32.mrb[0].mxu0
    %v793 = vpop.f32.mrb[0].mxu0
    %v794 = vadd.f32 0.0, %v793
    %v795 = vpop.f32.mrb[0].mxu0
    %796 = vdwg.mxu0
    %v797 = vmul.f32 %v767, 0.5
    %v798 = vmul.f32 %v770, 0.5
    %v799 = vmul.f32 %v775, 0.5
    %v800 = vmul.f32 %v778, 0.5
    %v801 = vmul.f32 %v783, 0.5
    %v802 = vmul.f32 %v786, 0.5
    %v803 = vmul.f32 %v791, 0.5
    %v804 = vmul.f32 %v794, 0.5
    %vm805 = vcmask 261120
    %v806 = vsel %vm805, %v797, -inf
    %v807 = vrot.slane %v806, 4
    %v808 = vmax.f32 %v806, %v807
    %v809 = vrot.slane %v808, 2
    %v810 = vmax.f32 %v808, %v809
    %v811 = vrot.slane %v810, 1
    %v812 = vmax.f32 %v810, %v811
    %v813 = vsel %vm805, %v798, -inf
    %v814 = vrot.slane %v813, 4
    %v815 = vmax.f32 %v813, %v814
    %v816 = vrot.slane %v815, 2
    %v817 = vmax.f32 %v815, %v816
    %v818 = vrot.slane %v817, 1
    %v819 = vmax.f32 %v817, %v818
    %v820 = vsel %vm805, %v799, -inf
    %v821 = vrot.slane %v820, 4
    %v822 = vmax.f32 %v820, %v821
    %v823 = vrot.slane %v822, 2
    %v824 = vmax.f32 %v822, %v823
    %v825 = vrot.slane %v824, 1
    %v826 = vmax.f32 %v824, %v825
    %v827 = vsel %vm805, %v800, -inf
    %v828 = vrot.slane %v827, 4
    %v829 = vmax.f32 %v827, %v828
    %v830 = vrot.slane %v829, 2
    %v831 = vmax.f32 %v829, %v830
    %v832 = vrot.slane %v831, 1
    %v833 = vmax.f32 %v831, %v832
    %v834 = vsel %vm805, %v801, -inf
    %v835 = vrot.slane %v834, 4
    %v836 = vmax.f32 %v834, %v835
    %v837 = vrot.slane %v836, 2
    %v838 = vmax.f32 %v836, %v837
    %v839 = vrot.slane %v838, 1
    %v840 = vmax.f32 %v838, %v839
    %v841 = vsel %vm805, %v802, -inf
    %v842 = vrot.slane %v841, 4
    %v843 = vmax.f32 %v841, %v842
    %v844 = vrot.slane %v843, 2
    %v845 = vmax.f32 %v843, %v844
    %v846 = vrot.slane %v845, 1
    %v847 = vmax.f32 %v845, %v846
    %v848 = vsel %vm805, %v803, -inf
    %v849 = vrot.slane %v848, 4
    %v850 = vmax.f32 %v848, %v849
    %v851 = vrot.slane %v850, 2
    %v852 = vmax.f32 %v850, %v851
    %v853 = vrot.slane %v852, 1
    %v854 = vmax.f32 %v852, %v853
    %v855 = vsel %vm805, %v804, -inf
    %v856 = vrot.slane %v855, 4
    %v857 = vmax.f32 %v855, %v856
    %v858 = vrot.slane %v857, 2
    %v859 = vmax.f32 %v857, %v858
    %v860 = vrot.slane %v859, 1
    %v861 = vmax.f32 %v859, %v860
    %v862 = vsub.f32 %v797, %v812
    %v863 = vsub.f32 %v798, %v819
    %v864 = vsub.f32 %v799, %v826
    %v865 = vsub.f32 %v800, %v833
    %v866 = vsub.f32 %v801, %v840
    %v867 = vsub.f32 %v802, %v847
    %v868 = vsub.f32 %v803, %v854
    %v869 = vsub.f32 %v804, %v861
    %v870 = vmul.f32 %v862, 1.442695
    %v871 = vpow.pop %v870
    %v872 = vmul.f32 %v863, 1.442695
    %v873 = vpow.pop %v872
    %v874 = vmul.f32 %v864, 1.442695
    %v875 = vpow.pop %v874
    %v876 = vmul.f32 %v865, 1.442695
    %v877 = vpow.pop %v876
    %v878 = vmul.f32 %v866, 1.442695
    %v879 = vpow.pop %v878
    %v880 = vmul.f32 %v867, 1.442695
    %v881 = vpow.pop %v880
    %v882 = vmul.f32 %v868, 1.442695
    %v883 = vpow.pop %v882
    %v884 = vmul.f32 %v869, 1.442695
    %v885 = vpow.pop %v884
    %v886 = vsel %vm805, %v871, 0.0
    %v887 = vrot.slane %v886, 4
    %v888 = vadd.f32 %v886, %v887
    %v889 = vrot.slane %v888, 2
    %v890 = vadd.f32 %v888, %v889
    %v891 = vrot.slane %v890, 1
    %v892 = vadd.f32 %v890, %v891
    %v893 = vsel %vm805, %v873, 0.0
    %v894 = vrot.slane %v893, 4
    %v895 = vadd.f32 %v893, %v894
    %v896 = vrot.slane %v895, 2
    %v897 = vadd.f32 %v895, %v896
    %v898 = vrot.slane %v897, 1
    %v899 = vadd.f32 %v897, %v898
    %v900 = vsel %vm805, %v875, 0.0
    %v901 = vrot.slane %v900, 4
    %v902 = vadd.f32 %v900, %v901
    %v903 = vrot.slane %v902, 2
    %v904 = vadd.f32 %v902, %v903
    %v905 = vrot.slane %v904, 1
    %v906 = vadd.f32 %v904, %v905
    %v907 = vsel %vm805, %v877, 0.0
    %v908 = vrot.slane %v907, 4
    %v909 = vadd.f32 %v907, %v908
    %v910 = vrot.slane %v909, 2
    %v911 = vadd.f32 %v909, %v910
    %v912 = vrot.slane %v911, 1
    %v913 = vadd.f32 %v911, %v912
    %v914 = vsel %vm805, %v879, 0.0
    %v915 = vrot.slane %v914, 4
    %v916 = vadd.f32 %v914, %v915
    %v917 = vrot.slane %v916, 2
    %v918 = vadd.f32 %v916, %v917
    %v919 = vrot.slane %v918, 1
    %v920 = vadd.f32 %v918, %v919
    %v921 = vsel %vm805, %v881, 0.0
    %v922 = vrot.slane %v921, 4
    %v923 = vadd.f32 %v921, %v922
    %v924 = vrot.slane %v923, 2
    %v925 = vadd.f32 %v923, %v924
    %v926 = vrot.slane %v925, 1
    %v927 = vadd.f32 %v925, %v926
    %v928 = vsel %vm805, %v883, 0.0
    %v929 = vrot.slane %v928, 4
    %v930 = vadd.f32 %v928, %v929
    %v931 = vrot.slane %v930, 2
    %v932 = vadd.f32 %v930, %v931
    %v933 = vrot.slane %v932, 1
    %v934 = vadd.f32 %v932, %v933
    %v935 = vsel %vm805, %v885, 0.0
    %v936 = vrot.slane %v935, 4
    %v937 = vadd.f32 %v935, %v936
    %v938 = vrot.slane %v937, 2
    %v939 = vadd.f32 %v937, %v938
    %v940 = vrot.slane %v939, 1
    %v941 = vadd.f32 %v939, %v940
    %v942 = vrcp.pop %v892
    %v943 = vrcp.pop %v899
    %v944 = vrcp.pop %v906
    %v945 = vrcp.pop %v913
    %v946 = vrcp.pop %v920
    %v947 = vrcp.pop %v927
    %v948 = vrcp.pop %v934
    %v949 = vrcp.pop %v941
    %v950 = vmul.f32 %v871, %v942
    %v951 = vmul.f32 %v873, %v943
    %v952 = vmul.f32 %v875, %v944
    %v953 = vmul.f32 %v877, %v945
    %v954 = vmul.f32 %v879, %v946
    %v955 = vmul.f32 %v881, %v947
    %v956 = vmul.f32 %v883, %v948
    %v957 = vmul.f32 %v885, %v949
    %v958 = vld [vmem:[%s10] sm:$0xff]
    %v959 = vld [vmem:[%s10 + $0x8] sm:$0xff]
    %v960 = vld [vmem:[%s10 + $0x10] sm:$0xff]
    %v961 = vld [vmem:[%s10 + $0x18] sm:$0xff]
    %v962 = vpack.c.bf16 %v951, %v950
    %v963 = vpack.c.bf16 %v953, %v952
    %v964 = vpack.c.bf16 %v955, %v954
    %v965 = vpack.c.bf16 %v957, %v956
    %v966 = vpack.c.bf16 %v959, %v958
    %v967 = vpack.c.bf16 %v961, %v960
    %v969 = vsel %vm805, %v962, 0
    %v972 = vsel %vm805, %v963, 0
    %v975 = vsel %vm805, %v964, 0
    %v978 = vsel %vm805, %v965, 0
    %980 = vmatprep.subr.bf16.mxu0 0
    %981 = vmatpush1.bf16.msra.mxu0 %v966
    %982 = vmatprep.subr.bf16.mxu0 0
    %983 = vmatpush1.bf16.msra.mxu0 %v967
    %984 = vmatprep.subr.bf16.mxu0 0
    %985 = vmatpush1.bf16.msra.mxu0 0
    %986 = vmatprep.subr.bf16.mxu0 0
    %987 = vmatpush1.bf16.msra.mxu0 0
    %988 = vmatprep.subr.bf16.mxu0 0
    %989 = vmatpush1.bf16.msra.mxu0 0
    %990 = vmatprep.subr.bf16.mxu0 0
    %991 = vmatpush1.bf16.msra.mxu0 0
    %992 = vmatprep.subr.bf16.mxu0 0
    %993 = vmatpush1.bf16.msra.mxu0 0
    %994 = vmatprep.subr.bf16.mxu0 0
    %995 = vmatpush1.bf16.msra.mxu0 0
    %996 = vmatprep.subr.bf16.mxu0 0
    %997 = vmatpush1.bf16.msra.mxu0 0
    %998 = vmatprep.subr.bf16.mxu0 0
    %999 = vmatpush1.bf16.msra.mxu0 0
    %1000 = vmatprep.subr.bf16.mxu0 0
    %1001 = vmatpush1.bf16.msra.mxu0 0
    %1002 = vmatprep.subr.bf16.mxu0 0
    %1003 = vmatpush1.bf16.msra.mxu0 0
    %1004 = vmatprep.subr.bf16.mxu0 0
    %1005 = vmatpush1.bf16.msra.mxu0 0
    %1006 = vmatprep.subr.bf16.mxu0 0
    %1007 = vmatpush1.bf16.msra.mxu0 0
    %1008 = vmatprep.subr.bf16.mxu0 0
    %1009 = vmatpush1.bf16.msra.mxu0 0
    %1010 = vmatprep.subr.bf16.mxu0 0
    %1011 = vmatpush1.bf16.msra.mxu0 0
    %1012 = vmatprep.mubr.bf16.mxu0 0
    %1013 = vmatmul.mubr.bf16.gmra.mrb[0].mxu0 %v969
    %v1014 = vpop.f32.mrb[0].mxu0
    %v1015 = vadd.f32 0.0, %v1014
    %v1016 = vpop.f32.mrb[0].mxu0
    %v1017 = vpop.f32.mrb[0].mxu0
    %v1018 = vadd.f32 0.0, %v1017
    %v1019 = vpop.f32.mrb[0].mxu0
    %1020 = vmatprep.mubr.bf16.mxu0 0
    %1021 = vmatmul.mubr.bf16.gmra.mrb[0].mxu0 %v972
    %v1022 = vpop.f32.mrb[0].mxu0
    %v1023 = vadd.f32 0.0, %v1022
    %v1024 = vpop.f32.mrb[0].mxu0
    %v1025 = vpop.f32.mrb[0].mxu0
    %v1026 = vadd.f32 0.0, %v1025
    %v1027 = vpop.f32.mrb[0].mxu0
    %1028 = vmatprep.mubr.bf16.mxu0 0
    %1029 = vmatmul.mubr.bf16.gmra.mrb[0].mxu0 %v975
    %v1030 = vpop.f32.mrb[0].mxu0
    %v1031 = vadd.f32 0.0, %v1030
    %v1032 = vpop.f32.mrb[0].mxu0
    %v1033 = vpop.f32.mrb[0].mxu0
    %v1034 = vadd.f32 0.0, %v1033
    %v1035 = vpop.f32.mrb[0].mxu0
    %1036 = vmatprep.mubr.bf16.mxu0 0
    %1037 = vmatmul.mubr.bf16.gmra.mrb[0].mxu0 %v978
    %v1038 = vpop.f32.mrb[0].mxu0
    %v1039 = vadd.f32 0.0, %v1038
    %v1040 = vpop.f32.mrb[0].mxu0
    %v1041 = vpop.f32.mrb[0].mxu0
    %v1042 = vadd.f32 0.0, %v1041
    %v1043 = vpop.f32.mrb[0].mxu0
    %1044 = vdwg.mxu0
    %v1045 = vadd.f32 %v358, %v568
    %v1046 = vadd.f32 %v358, %v571
    %v1047 = vadd.f32 %v358, %v576
    %v1048 = vadd.f32 %v358, %v579
    %v1049 = vadd.f32 %v358, %v584
    %v1050 = vadd.f32 %v358, %v587
    %v1051 = vadd.f32 %v358, %v592
    %v1052 = vadd.f32 %v358, %v595
    %v1053 = vmul.f32 %v1015, %v1045
    %v1054 = vmul.f32 %v1018, %v1046
    %v1055 = vmul.f32 %v1023, %v1047
    %v1056 = vmul.f32 %v1026, %v1048
    %v1057 = vmul.f32 %v1031, %v1049
    %v1058 = vmul.f32 %v1034, %v1050
    %v1059 = vmul.f32 %v1039, %v1051
    %v1060 = vmul.f32 %v1042, %v1052
    %v1061 = vrot.slane %v1053, 4
    %v1062 = vadd.f32 %v1053, %v1061
    %v1063 = vrot.slane %v1062, 2
    %v1064 = vadd.f32 %v1062, %v1063
    %v1065 = vrot.slane %v1064, 1
    %v1066 = vadd.f32 %v1064, %v1065
    %v1067 = vrot.slane %v1054, 4
    %v1068 = vadd.f32 %v1054, %v1067
    %v1069 = vrot.slane %v1068, 2
    %v1070 = vadd.f32 %v1068, %v1069
    %v1071 = vrot.slane %v1070, 1
    %v1072 = vadd.f32 %v1070, %v1071
    %v1073 = vrot.slane %v1055, 4
    %v1074 = vadd.f32 %v1055, %v1073
    %v1075 = vrot.slane %v1074, 2
    %v1076 = vadd.f32 %v1074, %v1075
    %v1077 = vrot.slane %v1076, 1
    %v1078 = vadd.f32 %v1076, %v1077
    %v1079 = vrot.slane %v1056, 4
    %v1080 = vadd.f32 %v1056, %v1079
    %v1081 = vrot.slane %v1080, 2
    %v1082 = vadd.f32 %v1080, %v1081
    %v1083 = vrot.slane %v1082, 1
    %v1084 = vadd.f32 %v1082, %v1083
    %v1085 = vrot.slane %v1057, 4
    %v1086 = vadd.f32 %v1057, %v1085
    %v1087 = vrot.slane %v1086, 2
    %v1088 = vadd.f32 %v1086, %v1087
    %v1089 = vrot.slane %v1088, 1
    %v1090 = vadd.f32 %v1088, %v1089
    %v1091 = vrot.slane %v1058, 4
    %v1092 = vadd.f32 %v1058, %v1091
    %v1093 = vrot.slane %v1092, 2
    %v1094 = vadd.f32 %v1092, %v1093
    %v1095 = vrot.slane %v1094, 1
    %v1096 = vadd.f32 %v1094, %v1095
    %v1097 = vrot.slane %v1059, 4
    %v1098 = vadd.f32 %v1059, %v1097
    %v1099 = vrot.slane %v1098, 2
    %v1100 = vadd.f32 %v1098, %v1099
    %v1101 = vrot.slane %v1100, 1
    %v1102 = vadd.f32 %v1100, %v1101
    %v1103 = vrot.slane %v1060, 4
    %v1104 = vadd.f32 %v1060, %v1103
    %v1105 = vrot.slane %v1104, 2
    %v1106 = vadd.f32 %v1104, %v1105
    %v1107 = vrot.slane %v1106, 1
    %v1108 = vadd.f32 %v1106, %v1107
    %v1109 = vld [vmem:[#allocation14] sm:$0xff]
    %v1110 = vld [vmem:[#allocation14 + $0x8] sm:$0xff]
    %v1111 = vld [vmem:[#allocation14 + $0x10] sm:$0xff]
    %v1112 = vld [vmem:[#allocation14 + $0x18] sm:$0xff]
    %v1113 = vld [vmem:[#allocation14 + $0x20] sm:$0xff]
    %v1114 = vld [vmem:[#allocation14 + $0x28] sm:$0xff]
    %v1115 = vld [vmem:[#allocation14 + $0x30] sm:$0xff]
    %v1116 = vld [vmem:[#allocation14 + $0x38] sm:$0xff]
    %v1117 = vld [vmem:[#allocation14 + $0x40] sm:$0xff]
    %v1118 = vld [vmem:[#allocation14 + $0x48] sm:$0xff]
    %v1119 = vld [vmem:[#allocation14 + $0x50] sm:$0xff]
    %v1120 = vld [vmem:[#allocation14 + $0x58] sm:$0xff]
    %v1121 = vld [vmem:[#allocation14 + $0x60] sm:$0xff]
    %v1122 = vld [vmem:[#allocation14 + $0x68] sm:$0xff]
    %v1123 = vld [vmem:[#allocation14 + $0x70] sm:$0xff]
    %v1124 = vld [vmem:[#allocation14 + $0x78] sm:$0xff]
    %v1125 = vpack.c.bf16 %v1066, %v1066
    %v1126 = vpack.c.bf16 %v1072, %v1072
    %v1127 = vpack.c.bf16 %v1078, %v1078
    %v1128 = vpack.c.bf16 %v1084, %v1084
    %v1129 = vpack.c.bf16 %v1090, %v1090
    %v1130 = vpack.c.bf16 %v1096, %v1096
    %v1131 = vpack.c.bf16 %v1102, %v1102
    %v1132 = vpack.c.bf16 %v1108, %v1108
    %v1133 = vpack.c.bf16 %v1110, %v1109
    %v1134 = vpack.c.bf16 %v1112, %v1111
    %v1135 = vpack.c.bf16 %v1114, %v1113
    %v1136 = vpack.c.bf16 %v1116, %v1115
    %v1137 = vpack.c.bf16 %v1118, %v1117
    %v1138 = vpack.c.bf16 %v1120, %v1119
    %v1139 = vpack.c.bf16 %v1122, %v1121
    %v1140 = vpack.c.bf16 %v1124, %v1123
    %v1141 = vld [vmem:[%s12] sm:$0x1]
    %v1143 = vlaneseq
    %v1144 = vshrl.u32 %v1143, 7
    %v1145 = vsub.s32 0, %v1144
    %v1146 = vrot.slane %v1141, %v1145
    %v1156 = vunpack.c.l.b16 %v1125
    %v1157 = vunpack.c.l.b16 %v1126
    %v1158 = vunpack.c.l.b16 %v1127
    %v1159 = vunpack.c.l.b16 %v1128
    %v1160 = vunpack.c.l.b16 %v1129
    %v1161 = vunpack.c.l.b16 %v1130
    %v1162 = vunpack.c.l.b16 %v1131
    %v1163 = vunpack.c.l.b16 %v1132
    %vm1164 = vcmask 1041409
    %v1165 = vsel %vm1164, %v1157, %v1156
    %vm1166 = vcmask 1042434
    %v1167 = vsel %vm1166, %v1158, %v1165
    %vm1168 = vcmask 1043459
    %v1169 = vsel %vm1168, %v1159, %v1167
    %vm1170 = vcmask 1044484
    %v1171 = vsel %vm1170, %v1160, %v1169
    %vm1172 = vcmask 1045509
    %v1173 = vsel %vm1172, %v1161, %v1171
    %vm1174 = vcmask 1046534
    %v1175 = vsel %vm1174, %v1162, %v1173
    %vm1176 = vcmask 1047559
    %v1177 = vsel %vm1176, %v1163, %v1175
    %v1178 = vpack.c.b16 %v1177, %v1177
    %1180 = vmatprep.subr.bf16.mxu0 0
    %1181 = vmatpush1.bf16.msra.mxu0 %v1133
    %1182 = vmatprep.subr.bf16.mxu0 0
    %1183 = vmatpush1.bf16.msra.mxu0 %v1134
    %1184 = vmatprep.subr.bf16.mxu0 0
    %1185 = vmatpush1.bf16.msra.mxu0 %v1135
    %1186 = vmatprep.subr.bf16.mxu0 0
    %1187 = vmatpush1.bf16.msra.mxu0 %v1136
    %1188 = vmatprep.subr.bf16.mxu0 0
    %1189 = vmatpush1.bf16.msra.mxu0 %v1137
    %1190 = vmatprep.subr.bf16.mxu0 0
    %1191 = vmatpush1.bf16.msra.mxu0 %v1138
    %1192 = vmatprep.subr.bf16.mxu0 0
    %1193 = vmatpush1.bf16.msra.mxu0 %v1139
    %1194 = vmatprep.subr.bf16.mxu0 0
    %1195 = vmatpush1.bf16.msra.mxu0 %v1140
    %1196 = vmatprep.subr.bf16.mxu0 0
    %1197 = vmatpush1.bf16.msra.mxu0 0
    %1198 = vmatprep.subr.bf16.mxu0 0
    %1199 = vmatpush1.bf16.msra.mxu0 0
    %1200 = vmatprep.subr.bf16.mxu0 0
    %1201 = vmatpush1.bf16.msra.mxu0 0
    %1202 = vmatprep.subr.bf16.mxu0 0
    %1203 = vmatpush1.bf16.msra.mxu0 0
    %1204 = vmatprep.subr.bf16.mxu0 0
    %1205 = vmatpush1.bf16.msra.mxu0 0
    %1206 = vmatprep.subr.bf16.mxu0 0
    %1207 = vmatpush1.bf16.msra.mxu0 0
    %1208 = vmatprep.subr.bf16.mxu0 0
    %1209 = vmatpush1.bf16.msra.mxu0 0
    %1210 = vmatprep.subr.bf16.mxu0 0
    %1211 = vmatpush1.bf16.msra.mxu0 0
    %1212 = vmatprep.mubr.bf16.mxu0 0
    %1213 = vmatmul.mubr.bf16.gmra.mrb[0].mxu0 %v1178
    %v1214 = vpop.f32.mrb[0].mxu0
    %v1215 = vadd.f32 %v1146, %v1214
    %v1216 = vpop.f32.mrb[0].mxu0
    %v1217 = vpop.f32.mrb[0].mxu0
    %v1218 = vpop.f32.mrb[0].mxu0
    %1219 = vdwg.mxu0
    %v1220 = vld [vmem:[#allocation16] sm:$0xff]
    %v1221 = vld [vmem:[#allocation16 + $0x8] sm:$0xff]
    %v1222 = vld [vmem:[#allocation16 + $0x10] sm:$0xff]
    %v1223 = vld [vmem:[#allocation16 + $0x18] sm:$0xff]
    %v1224 = vld [vmem:[#allocation16 + $0x20] sm:$0xff]
    %v1225 = vld [vmem:[#allocation16 + $0x28] sm:$0xff]
    %v1226 = vld [vmem:[#allocation16 + $0x30] sm:$0xff]
    %v1227 = vld [vmem:[#allocation16 + $0x38] sm:$0xff]
    %v1228 = vld [vmem:[#allocation16 + $0x40] sm:$0xff]
    %v1229 = vld [vmem:[#allocation16 + $0x48] sm:$0xff]
    %v1230 = vld [vmem:[#allocation16 + $0x50] sm:$0xff]
    %v1231 = vld [vmem:[#allocation16 + $0x58] sm:$0xff]
    %v1232 = vld [vmem:[#allocation16 + $0x60] sm:$0xff]
    %v1233 = vld [vmem:[#allocation16 + $0x68] sm:$0xff]
    %v1234 = vld [vmem:[#allocation16 + $0x70] sm:$0xff]
    %v1235 = vld [vmem:[#allocation16 + $0x78] sm:$0xff]
    %v1236 = vpack.c.bf16 %v1215, %v1215
    %v1237 = vpack.c.bf16 %v1221, %v1220
    %v1238 = vpack.c.bf16 %v1223, %v1222
    %v1239 = vpack.c.bf16 %v1225, %v1224
    %v1240 = vpack.c.bf16 %v1227, %v1226
    %v1241 = vpack.c.bf16 %v1229, %v1228
    %v1242 = vpack.c.bf16 %v1231, %v1230
    %v1243 = vpack.c.bf16 %v1233, %v1232
    %v1244 = vpack.c.bf16 %v1235, %v1234
    %v1245 = vld [vmem:[%s14] sm:$0x1]
    %v1247 = vlaneseq
    %v1248 = vshrl.u32 %v1247, 7
    %v1249 = vsub.s32 0, %v1248
    %v1250 = vrot.slane %v1245, %v1249
    %1252 = vmatprep.subr.bf16.mxu0 0
    %1253 = vmatpush1.bf16.msra.mxu0 %v1237
    %1254 = vmatprep.subr.bf16.mxu0 0
    %1255 = vmatpush1.bf16.msra.mxu0 %v1238
    %1256 = vmatprep.subr.bf16.mxu0 0
    %1257 = vmatpush1.bf16.msra.mxu0 %v1239
    %1258 = vmatprep.subr.bf16.mxu0 0
    %1259 = vmatpush1.bf16.msra.mxu0 %v1240
    %1260 = vmatprep.subr.bf16.mxu0 0
    %1261 = vmatpush1.bf16.msra.mxu0 %v1241
    %1262 = vmatprep.subr.bf16.mxu0 0
    %1263 = vmatpush1.bf16.msra.mxu0 %v1242
    %1264 = vmatprep.subr.bf16.mxu0 0
    %1265 = vmatpush1.bf16.msra.mxu0 %v1243
    %1266 = vmatprep.subr.bf16.mxu0 0
    %1267 = vmatpush1.bf16.msra.mxu0 %v1244
    %1268 = vmatprep.subr.bf16.mxu0 0
    %1269 = vmatpush1.bf16.msra.mxu0 0
    %1270 = vmatprep.subr.bf16.mxu0 0
    %1271 = vmatpush1.bf16.msra.mxu0 0
    %1272 = vmatprep.subr.bf16.mxu0 0
    %1273 = vmatpush1.bf16.msra.mxu0 0
    %1274 = vmatprep.subr.bf16.mxu0 0
    %1275 = vmatpush1.bf16.msra.mxu0 0
    %1276 = vmatprep.subr.bf16.mxu0 0
    %1277 = vmatpush1.bf16.msra.mxu0 0
    %1278 = vmatprep.subr.bf16.mxu0 0
    %1279 = vmatpush1.bf16.msra.mxu0 0
    %1280 = vmatprep.subr.bf16.mxu0 0
    %1281 = vmatpush1.bf16.msra.mxu0 0
    %1282 = vmatprep.subr.bf16.mxu0 0
    %1283 = vmatpush1.bf16.msra.mxu0 0
    %1284 = vmatprep.mubr.bf16.mxu0 0
    %1285 = vmatmul.mubr.bf16.gmra.mrb[0].mxu0 %v1236
    %v1286 = vpop.f32.mrb[0].mxu0
    %v1287 = vadd.f32 %v1250, %v1286
    %v1288 = vpop.f32.mrb[0].mxu0
    %v1289 = vpop.f32.mrb[0].mxu0
    %v1290 = vpop.f32.mrb[0].mxu0
    %1291 = vdwg.mxu0
    %v1292 = vmax.f32 %v1287, 0.0
    %v1293 = vld [vmem:[#allocation17] sm:$0xff]
    %v1294 = vld [vmem:[#allocation17 + $0x8] sm:$0xff]
    %v1295 = vld [vmem:[#allocation17 + $0x10] sm:$0xff]
    %v1296 = vld [vmem:[#allocation17 + $0x18] sm:$0xff]
    %v1297 = vld [vmem:[#allocation17 + $0x20] sm:$0xff]
    %v1298 = vld [vmem:[#allocation17 + $0x28] sm:$0xff]
    %v1299 = vld [vmem:[#allocation17 + $0x30] sm:$0xff]
    %v1300 = vld [vmem:[#allocation17 + $0x38] sm:$0xff]
    %v1301 = vld [vmem:[#allocation17 + $0x40] sm:$0xff]
    %v1302 = vld [vmem:[#allocation17 + $0x48] sm:$0xff]
    %v1303 = vld [vmem:[#allocation17 + $0x50] sm:$0xff]
    %v1304 = vld [vmem:[#allocation17 + $0x58] sm:$0xff]
    %v1305 = vld [vmem:[#allocation17 + $0x60] sm:$0xff]
    %v1306 = vld [vmem:[#allocation17 + $0x68] sm:$0xff]
    %v1307 = vld [vmem:[#allocation17 + $0x70] sm:$0xff]
    %v1308 = vld [vmem:[#allocation17 + $0x78] sm:$0xff]
    %v1309 = vpack.c.bf16 %v1292, %v1292
    %v1310 = vpack.c.bf16 %v1294, %v1293
    %v1311 = vpack.c.bf16 %v1296, %v1295
    %v1312 = vpack.c.bf16 %v1298, %v1297
    %v1313 = vpack.c.bf16 %v1300, %v1299
    %v1314 = vpack.c.bf16 %v1302, %v1301
    %v1315 = vpack.c.bf16 %v1304, %v1303
    %v1316 = vpack.c.bf16 %v1306, %v1305
    %v1317 = vpack.c.bf16 %v1308, %v1307
    %v1318 = vld [vmem:[%s16] sm:$0x1]
    %v1320 = vlaneseq
    %v1321 = vshrl.u32 %v1320, 7
    %v1322 = vsub.s32 0, %v1321
    %v1323 = vrot.slane %v1318, %v1322
    %1325 = vmatprep.subr.bf16.mxu0 0
    %1326 = vmatpush1.bf16.msra.mxu0 %v1310
    %1327 = vmatprep.subr.bf16.mxu0 0
    %1328 = vmatpush1.bf16.msra.mxu0 %v1311
    %1329 = vmatprep.subr.bf16.mxu0 0
    %1330 = vmatpush1.bf16.msra.mxu0 %v1312
    %1331 = vmatprep.subr.bf16.mxu0 0
    %1332 = vmatpush1.bf16.msra.mxu0 %v1313
    %1333 = vmatprep.subr.bf16.mxu0 0
    %1334 = vmatpush1.bf16.msra.mxu0 %v1314
    %1335 = vmatprep.subr.bf16.mxu0 0
    %1336 = vmatpush1.bf16.msra.mxu0 %v1315
    %1337 = vmatprep.subr.bf16.mxu0 0
    %1338 = vmatpush1.bf16.msra.mxu0 %v1316
    %1339 = vmatprep.subr.bf16.mxu0 0
    %1340 = vmatpush1.bf16.msra.mxu0 %v1317
    %1341 = vmatprep.subr.bf16.mxu0 0
    %1342 = vmatpush1.bf16.msra.mxu0 0
    %1343 = vmatprep.subr.bf16.mxu0 0
    %1344 = vmatpush1.bf16.msra.mxu0 0
    %1345 = vmatprep.subr.bf16.mxu0 0
    %1346 = vmatpush1.bf16.msra.mxu0 0
    %1347 = vmatprep.subr.bf16.mxu0 0
    %1348 = vmatpush1.bf16.msra.mxu0 0
    %1349 = vmatprep.subr.bf16.mxu0 0
    %1350 = vmatpush1.bf16.msra.mxu0 0
    %1351 = vmatprep.subr.bf16.mxu0 0
    %1352 = vmatpush1.bf16.msra.mxu0 0
    %1353 = vmatprep.subr.bf16.mxu0 0
    %1354 = vmatpush1.bf16.msra.mxu0 0
    %1355 = vmatprep.subr.bf16.mxu0 0
    %1356 = vmatpush1.bf16.msra.mxu0 0
    %1357 = vmatprep.mubr.bf16.mxu0 0
    %1358 = vmatmul.mubr.bf16.gmra.mrb[0].mxu0 %v1309
    %v1359 = vpop.f32.mrb[0].mxu0
    %v1360 = vadd.f32 %v1323, %v1359
    %v1361 = vpop.f32.mrb[0].mxu0
    %v1362 = vpop.f32.mrb[0].mxu0
    %v1363 = vpop.f32.mrb[0].mxu0
    %1364 = vdwg.mxu0
    %1365 = vst [vmem:[#allocation19] sm:$0xff] %v1360
    // Predicated region
    $region110: #{tpu_custom_call.1} parent=1 // pred_check
      _
    $region111: #{tpu_custom_call.1} parent=1 // pred_check_branch
      %1367 = sbr.rel (0) target = $region113
    $region112: #{tpu_custom_call.1} parent=1 // pred_region
      %s1369 = ssub.s32 128, 128
      %1370 = vsyncadd [#allocation4], %s1369
      %s1372 = sshll.u32 [#allocation19], 4
      %s1373 = int_to_ptr.vmem [resolvable:$true] %s1372
      %1375 = dma.vmem_to_hbm [thread:$0]  %s1373, 128, %s17, [#allocation4]
    $region113: #{tpu_custom_call.1} parent=1 // pred_fallthru
      _
    // Predicated region
    $region114: #{tpu_custom_call.1} parent=1 // pred_check
      _
    $region115: #{tpu_custom_call.1} parent=1 // pred_check_branch
      %1377 = sbr.rel (0) target = $region117
    $region116: #{tpu_custom_call.1} parent=1 // pred_region
      %1378 = dma.done [#allocation4], 128
    $region117: #{tpu_custom_call.1} parent=1 // pred_fallthru
      _
    %1379 = vsyncpa [#allocation3], 1
    %1380 = vsyncpa [#allocation6], 1
    %1381 = vsyncpa [#allocation9], 1
    %1382 = vsyncpa [#allocation12], 1
    %1383 = vsyncpa [#allocation15], 1
    %1384 = vsyncpa [#allocation18], 1
    %1385 = vsyncpa [#allocation4], 1

</llo_original>
